<compile_context>
chip_gen: v5e
topology: v5e:2x2
jax: 0.10.0
libtpu: 0.0.40
codegen_flags: <defaults>
</compile_context>

<pallas_src>
import jax
import jax.numpy as jnp
from jax.experimental import pallas as pl
from jax.experimental.pallas import tpu as pltpu


def _info_agg_kernel(blend_ref, q_ref, m_ref, f_ref, wq_ref, wk_ref, wkv_ref,
                     o_ref, k1_scr, k2_scr, v_scr):
    # blend_ref: (2,) SMEM scalars (w1, w2) = (0.5, mu) / (0.5 + mu).
    # q_ref:  (1, c, tq)  query-feature tile (channels-first).
    # m_ref:  (1, c, n)   mask features.
    # f_ref:  (1, c, n)   support features.
    # wq_ref: (d, c), wk_ref: (d, c), wkv_ref: (2d, c) stacked [wk^T; wv^T].
    # o_ref:  (1, d, tq)  output tile (residual already added), d == c.
    # k1_scr/k2_scr/v_scr: (d, n) bf16 VMEM scratch caching key/value
    #   projections across the query-tile axis (recomputed once per batch).
    f32 = jnp.float32
    bf16 = jnp.bfloat16
    d = wq_ref.shape[0]

    # Key / value projections depend only on the batch index -> compute them
    # once per batch element.  The query-tile axis is innermost and marked
    # "arbitrary", so j == 0 always runs before the other tiles of a batch.
    @pl.when(pl.program_id(1) == 0)
    def _():
        xm = m_ref[0]                                                 # (c, n)
        xf = f_ref[0]                                                 # (c, n)
        k2t = jnp.dot(wk_ref[...], xm, preferred_element_type=f32)    # (d, n)  = K2^T
        kvt = jnp.dot(wkv_ref[...], xf, preferred_element_type=f32)   # (2d, n) = [K1^T; V^T]
        k1_scr[...] = kvt[:d].astype(bf16)
        v_scr[...] = kvt[d:].astype(bf16)
        k2_scr[...] = k2t.astype(bf16)

    xq = q_ref[0]                                                     # (c, tq)
    qt = jnp.dot(wq_ref[...], xq, preferred_element_type=f32)         # (d, tq) = Q^T
    # Only this small (d, tq) -> (tq, d) transpose is needed; every n^2-scale
    # tensor stays lane-dense (token axis on lanes).
    q_tok = qt.T.astype(bf16)                                         # (tq, d)

    # n^2-scale score matmuls on the MXU: bf16 operands, f32 accumulation.
    a1 = jnp.dot(q_tok, k1_scr[...], preferred_element_type=f32)      # (tq, n)
    a2 = jnp.dot(q_tok, k2_scr[...], preferred_element_type=f32)      # (tq, n)

    # Stable softmax with the blend weight folded into the (tq, 1) normalizer:
    # saves two full (tq, n) VPU multiplies vs. normalize-then-blend.
    def _exp_and_scale(a, w):
        a = a - jnp.max(a, axis=-1, keepdims=True)
        e = jnp.exp(a)
        r = pl.reciprocal(jnp.sum(e, axis=-1, keepdims=True), approx=True) * w
        return e, r

    e1, r1 = _exp_and_scale(a1, blend_ref[0])
    e2, r2 = _exp_and_scale(a2, blend_ref[1])
    a = e1 * r1 + e2 * r2                                             # (tq, n)

    # att^T = V^T @ A^T: contract the key axis directly (trans-B matmul), so no
    # (tq, n) transpose is materialized and the result is already (d, tq).
    att_t = jax.lax.dot_general(
        v_scr[...], a.astype(bf16),
        dimension_numbers=(((1,), (1,)), ((), ())),
        preferred_element_type=f32)                                   # (d, tq)

    # Residual add (requires d == c); channels-first -> lane-dense store.
    o_ref[0] = xq + att_t


def _pick_query_tile(n, max_query_tile):
    """Largest multiple of 128 that divides n and is <= max_query_tile,
    else the full token count (keeps the (8, 128) block rule satisfied)."""
    if n <= max_query_tile:
        return n
    for cand in range(max_query_tile, 0, -128):
        if cand % 128 == 0 and n % cand == 0:
            return cand
    return n


def info_aggregation(qry_fts, mask_fts, fts, wq, wk, wv, mu, *, max_query_tile=512):
    """qry_fts/mask_fts/fts: NCHW (b, c, h, w); wq/wk/wv: (dim_in=c, dim_hid) in
    the 'y = x @ W' convention; mu: (1,).  Returns qry_fts + aggregated features,
    NCHW (matches the PyTorch forward)."""
    b, c, h, w = qry_fts.shape
    n = h * w
    d = wq.shape[1]
    assert d == c, "dim_hid must equal dim_in (channel count) for the residual view"

    # (b, c, n) is exactly the NCHW flatten: zero-cost, no HBM transposes.
    xq = qry_fts.reshape(b, c, n)
    xm = mask_fts.reshape(b, c, n)
    xf = fts.reshape(b, c, n)

    # Channels-first projection weights: y^T = W^T @ x^T, with W^T of shape (d, c).
    wq_t = jnp.asarray(wq, jnp.float32).T
    wk_t = jnp.asarray(wk, jnp.float32).T
    wkv_t = jnp.concatenate([wk_t, jnp.asarray(wv, jnp.float32).T], axis=0)  # (2d, c)

    # Scalar blend weights computed once (removes all n^2 divides from the kernel).
    mu0 = jnp.asarray(mu, jnp.float32)[0]
    denom = 0.5 + mu0
    blend = jnp.stack([0.5 / denom, mu0 / denom]).astype(jnp.float32)        # (2,)

    # Query-row tiling bounds the (tq, n) score temporaries in VMEM (v7x has
    # only 64 MiB) and gives the pipeline / megacore more grid steps than b.
    tq = _pick_query_tile(n, max_query_tile)
    n_q_tiles = n // tq
    # TODO(synk): for n >> 2048, switch to an online-softmax over key tiles so
    # the (tq, n) score fields never materialize.

    full_tokens = pl.BlockSpec((1, c, n), lambda i, j: (i, 0, 0))

    def weight_spec(rows):
        return pl.BlockSpec((rows, c), lambda i, j: (0, 0))

    # Advisory cost estimate: transcendental / VPU heavy, not FLOP heavy.
    steps = b * n_q_tiles
    flops = int(
        b * (2 * c * d * n + 2 * c * (2 * d) * n)        # per-batch K2 + fused K1/V proj
        + steps * (2 * c * d * tq                        # Q projection
                   + 2 * 2 * tq * n * d                  # two Q K^T score matmuls
                   + 2 * tq * n * d                      # A @ V
                   + 5 * tq * n))                        # softmax + blend elementwise
    transcendentals = int(steps * 2 * tq * n)            # exp of both score fields
    bytes_accessed = int(steps * 4 * (c * tq + d * tq)
                         + b * 4 * 2 * c * n
                         + 4 * (4 * d * c) + 8)

    out_cn = pl.pallas_call(
        _info_agg_kernel,
        out_shape=jax.ShapeDtypeStruct((b, d, n), jnp.float32),
        grid=(b, n_q_tiles),
        in_specs=[
            pl.BlockSpec(memory_space=pltpu.MemorySpace.SMEM),       # blend scalars
            pl.BlockSpec((1, c, tq), lambda i, j: (i, 0, j)),        # query tile
            full_tokens,                                             # mask features
            full_tokens,                                             # support features
            weight_spec(d),                                          # wq^T
            weight_spec(d),                                          # wk^T
            weight_spec(2 * d),                                      # [wk^T; wv^T]
        ],
        out_specs=pl.BlockSpec((1, d, tq), lambda i, j: (i, 0, j)),
        scratch_shapes=[
            pltpu.VMEM((d, n), jnp.bfloat16),                        # K1^T cache
            pltpu.VMEM((d, n), jnp.bfloat16),                        # K2^T cache
            pltpu.VMEM((d, n), jnp.bfloat16),                        # V^T  cache
        ],
        compiler_params=pltpu.CompilerParams(
            # Query-tile axis must stay sequential ("arbitrary") because the
            # per-batch K/V projection cache is written only at j == 0.
            dimension_semantics=("parallel", "arbitrary"),
            vmem_limit_bytes=32 * 1024 * 1024,
        ),
        cost_estimate=pl.CostEstimate(
            flops=flops, transcendentals=transcendentals, bytes_accessed=bytes_accessed),
    )(blend, xq, xm, xf, wq_t, wk_t, wkv_t)

    # (b, d, n) -> NCHW is a free reshape (d == c).
    return out_cn.reshape(b, d, h, w)


def _reference(qry_fts, mask_fts, fts, wq, wk, wv, mu):
    b, c, h, w = qry_fts.shape
    n = h * w
    xq = jnp.transpose(qry_fts.reshape(b, c, n), (0, 2, 1))
    xm = jnp.transpose(mask_fts.reshape(b, c, n), (0, 2, 1))
    xf = jnp.transpose(fts.reshape(b, c, n), (0, 2, 1))
    Q = xq @ wq
    K1 = xf @ wk
    K2 = xm @ wk
    V = xf @ wv
    A1 = jax.nn.softmax(Q @ jnp.swapaxes(K1, 1, 2), axis=2)
    A2 = jax.nn.softmax(Q @ jnp.swapaxes(K2, 1, 2), axis=2)
    A = (A1 * 0.5 + A2 * mu[0]) / (0.5 + mu[0])
    att = A @ V
    return qry_fts + jnp.transpose(att.reshape(b, h, w, c), (0, 3, 1, 2))


if __name__ == "__main__":
    # Shapes implied by the module: dim_in == dim_hid == channel count c.
    b, c, h, w = 2, 4, 16, 16
    dim_in = dim_hid = c

    key = jax.random.PRNGKey(0)
    k1, k2, k3, k4, k5, k6 = jax.random.split(key, 6)

    qry_fts = jax.random.normal(k1, (b, c, h, w), dtype=jnp.float32)
    mask_fts = jax.random.normal(k2, (b, c, h, w), dtype=jnp.float32)
    fts = jax.random.normal(k3, (b, c, h, w), dtype=jnp.float32)

    # nn.Linear(dim_in, dim_hid, bias=False) weight is (dim_hid, dim_in);
    # y = x @ W.T, so store pre-transposed (dim_in, dim_hid) matrices.
    scale = 1.0 / jnp.sqrt(jnp.float32(dim_in))
    wq = jax.random.uniform(k4, (dim_in, dim_hid), jnp.float32, -scale, scale)
    wk = jax.random.uniform(k5, (dim_in, dim_hid), jnp.float32, -scale, scale)
    wv = jax.random.uniform(k6, (dim_in, dim_hid), jnp.float32, -scale, scale)
    mu = jnp.array([0.5], dtype=jnp.float32)  # nn.Parameter(torch.tensor([0.5]))

    out = info_aggregation(qry_fts, mask_fts, fts, wq, wk, wv, mu)
    out = jax.block_until_ready(out)

    ref = _reference(qry_fts, mask_fts, fts, wq, wk, wv, mu)
    assert out.shape == (b, c, h, w)
    # bf16 MXU operands + approx reciprocal inside the kernel -> looser tolerance
    # than a pure-f32 comparison.
    assert jnp.allclose(out, ref, atol=3e-2, rtol=3e-2), float(jnp.max(jnp.abs(out - ref)))

    print("KERNEL_OK")
</pallas_src>

<mosaic_0001>
module attributes {stable_mosaic.version = 11 : i64} {
  func.func @_info_agg_kernel(%arg0: i32, %arg1: i32, %arg2: memref<2xf32, #tpu.memory_space<smem>>, %arg3: memref<1x4x256xf32, #tpu.memory_space<vmem>>, %arg4: memref<1x4x256xf32, #tpu.memory_space<vmem>>, %arg5: memref<1x4x256xf32, #tpu.memory_space<vmem>>, %arg6: memref<4x4xf32, #tpu.memory_space<vmem>>, %arg7: memref<4x4xf32, #tpu.memory_space<vmem>>, %arg8: memref<8x4xf32, #tpu.memory_space<vmem>>, %arg9: memref<1x4x256xf32, #tpu.memory_space<vmem>>, %arg10: memref<4x256xbf16, #tpu.memory_space<vmem>>, %arg11: memref<4x256xbf16, #tpu.memory_space<vmem>>, %arg12: memref<4x256xbf16, #tpu.memory_space<vmem>>) attributes {dimension_semantics = [#tpu.dimension_semantics<parallel>, #tpu.dimension_semantics<arbitrary>], iteration_bounds = array<i64: 2, 1>, scalar_prefetch = 0 : i64, scratch_operands = 3 : i64, tpu.core_type = #tpu.core_type<tc>, window_params = [{transform_indices = @transform_0, window_bounds = array<i64: 2>}, {transform_indices = @transform_1, window_bounds = array<i64: 1, 4, 256>}, {transform_indices = @transform_2, window_bounds = array<i64: 1, 4, 256>}, {transform_indices = @transform_3, window_bounds = array<i64: 1, 4, 256>}, {pipeline_mode = #tpu.pipeline_mode<synchronous>, transform_indices = @transform_4, window_bounds = array<i64: 4, 4>}, {pipeline_mode = #tpu.pipeline_mode<synchronous>, transform_indices = @transform_5, window_bounds = array<i64: 4, 4>}, {pipeline_mode = #tpu.pipeline_mode<synchronous>, transform_indices = @transform_6, window_bounds = array<i64: 8, 4>}, {transform_indices = @transform_7, window_bounds = array<i64: 1, 4, 256>}]} {
    %c0_i32 = arith.constant 0 : i32
    %0 = arith.cmpi eq, %arg1, %c0_i32 : i32
    %1 = arith.extui %0 : i1 to i32
    %c0_i32_0 = arith.constant 0 : i32
    %2 = arith.cmpi ne, %1, %c0_i32_0 : i32
    scf.if %2 {
      %c0_22 = arith.constant 0 : index
      %c0_23 = arith.constant 0 : index
      %c0_24 = arith.constant 0 : index
      %47 = vector.load %arg4[%c0_22, %c0_23, %c0_24] : memref<1x4x256xf32, #tpu.memory_space<vmem>>, vector<1x4x256xf32>
      %48 = vector.shape_cast %47 : vector<1x4x256xf32> to vector<4x256xf32>
      %c0_25 = arith.constant 0 : index
      %c0_26 = arith.constant 0 : index
      %c0_27 = arith.constant 0 : index
      %49 = vector.load %arg5[%c0_25, %c0_26, %c0_27] : memref<1x4x256xf32, #tpu.memory_space<vmem>>, vector<1x4x256xf32>
      %50 = vector.shape_cast %49 : vector<1x4x256xf32> to vector<4x256xf32>
      %c0_28 = arith.constant 0 : index
      %c0_29 = arith.constant 0 : index
      %51 = vector.load %arg7[%c0_28, %c0_29] : memref<4x4xf32, #tpu.memory_space<vmem>>, vector<4x4xf32>
      %cst_30 = arith.constant dense<0.000000e+00> : vector<4x256xf32>
      %52 = tpu.matmul %51, %48, %cst_30 {dimension_numbers = #tpu.dot_dimension_numbers<[1], [0], [0], [1], [0, 0, 1, 1], [], []>} : vector<4x4xf32>, vector<4x256xf32>, vector<4x256xf32> -> vector<4x256xf32>
      %c0_31 = arith.constant 0 : index
      %c0_32 = arith.constant 0 : index
      %53 = vector.load %arg8[%c0_31, %c0_32] : memref<8x4xf32, #tpu.memory_space<vmem>>, vector<8x4xf32>
      %cst_33 = arith.constant dense<0.000000e+00> : vector<8x256xf32>
      %54 = tpu.matmul %53, %50, %cst_33 {dimension_numbers = #tpu.dot_dimension_numbers<[1], [0], [0], [1], [0, 0, 1, 1], [], []>} : vector<8x4xf32>, vector<4x256xf32>, vector<8x256xf32> -> vector<8x256xf32>
      %55 = vector.extract_strided_slice %54 {offsets = [0, 0], sizes = [4, 256], strides = [1, 1]} : vector<8x256xf32> to vector<4x256xf32>
      %56 = arith.truncf %55 : vector<4x256xf32> to vector<4x256xbf16>
      %c0_34 = arith.constant 0 : index
      %c0_35 = arith.constant 0 : index
      %57 = vector.load %arg10[%c0_34, %c0_35] : memref<4x256xbf16, #tpu.memory_space<vmem>>, vector<4x256xbf16>
      tpu.vector_store %arg10[%c0_34, %c0_35], %56 {strides = array<i32>} : memref<4x256xbf16, #tpu.memory_space<vmem>>, vector<4x256xbf16>,
      %58 = vector.extract_strided_slice %54 {offsets = [4, 0], sizes = [4, 256], strides = [1, 1]} : vector<8x256xf32> to vector<4x256xf32>
      %59 = arith.truncf %58 : vector<4x256xf32> to vector<4x256xbf16>
      %c0_36 = arith.constant 0 : index
      %c0_37 = arith.constant 0 : index
      %60 = vector.load %arg12[%c0_36, %c0_37] : memref<4x256xbf16, #tpu.memory_space<vmem>>, vector<4x256xbf16>
      tpu.vector_store %arg12[%c0_36, %c0_37], %59 {strides = array<i32>} : memref<4x256xbf16, #tpu.memory_space<vmem>>, vector<4x256xbf16>,
      %61 = arith.truncf %52 : vector<4x256xf32> to vector<4x256xbf16>
      %c0_38 = arith.constant 0 : index
      %c0_39 = arith.constant 0 : index
      %62 = vector.load %arg11[%c0_38, %c0_39] : memref<4x256xbf16, #tpu.memory_space<vmem>>, vector<4x256xbf16>
      tpu.vector_store %arg11[%c0_38, %c0_39], %61 {strides = array<i32>} : memref<4x256xbf16, #tpu.memory_space<vmem>>, vector<4x256xbf16>,
    } else {
    }
    %c0 = arith.constant 0 : index
    %c0_1 = arith.constant 0 : index
    %c0_2 = arith.constant 0 : index
    %3 = vector.load %arg3[%c0, %c0_1, %c0_2] : memref<1x4x256xf32, #tpu.memory_space<vmem>>, vector<1x4x256xf32>
    %4 = vector.shape_cast %3 : vector<1x4x256xf32> to vector<4x256xf32>
    %c0_3 = arith.constant 0 : index
    %c0_4 = arith.constant 0 : index
    %5 = vector.load %arg6[%c0_3, %c0_4] : memref<4x4xf32, #tpu.memory_space<vmem>>, vector<4x4xf32>
    %cst = arith.constant dense<0.000000e+00> : vector<4x256xf32>
    %6 = tpu.matmul %5, %4, %cst {dimension_numbers = #tpu.dot_dimension_numbers<[1], [0], [0], [1], [0, 0, 1, 1], [], []>} : vector<4x4xf32>, vector<4x256xf32>, vector<4x256xf32> -> vector<4x256xf32>
    %7 = tpu.transpose %6, [1, 0] : vector<4x256xf32> -> vector<256x4xf32>
    %8 = arith.truncf %7 : vector<256x4xf32> to vector<256x4xbf16>
    %c0_5 = arith.constant 0 : index
    %c0_6 = arith.constant 0 : index
    %9 = vector.load %arg10[%c0_5, %c0_6] : memref<4x256xbf16, #tpu.memory_space<vmem>>, vector<4x256xbf16>
    %cst_7 = arith.constant dense<0.000000e+00> : vector<256x256xf32>
    %10 = tpu.matmul %8, %9, %cst_7 {dimension_numbers = #tpu.dot_dimension_numbers<[1], [0], [0], [1], [0, 0, 1, 1], [], []>} : vector<256x4xbf16>, vector<4x256xbf16>, vector<256x256xf32> -> vector<256x256xf32>
    %c0_8 = arith.constant 0 : index
    %c0_9 = arith.constant 0 : index
    %11 = vector.load %arg11[%c0_8, %c0_9] : memref<4x256xbf16, #tpu.memory_space<vmem>>, vector<4x256xbf16>
    %cst_10 = arith.constant dense<0.000000e+00> : vector<256x256xf32>
    %12 = tpu.matmul %8, %11, %cst_10 {dimension_numbers = #tpu.dot_dimension_numbers<[1], [0], [0], [1], [0, 0, 1, 1], [], []>} : vector<256x4xbf16>, vector<4x256xbf16>, vector<256x256xf32> -> vector<256x256xf32>
    %c0_11 = arith.constant 0 : index
    %13 = memref.load %arg2[%c0_11] : memref<2xf32, #tpu.memory_space<smem>>
    %cst_12 = arith.constant dense<0xFF800000> : vector<256xf32>
    %14 = vector.multi_reduction <maximumf>, %10, %cst_12 [1] : vector<256x256xf32> to vector<256xf32>
    %15 = vector.shape_cast %14 : vector<256xf32> to vector<256x1xf32>
    %16 = vector.broadcast %15 : vector<256x1xf32> to vector<256x256xf32>
    %17 = arith.subf %10, %16 : vector<256x256xf32>
    %18 = math.exp %17 : vector<256x256xf32>
    %cst_13 = arith.constant dense<0.000000e+00> : vector<256xf32>
    %19 = vector.multi_reduction <add>, %18, %cst_13 [1] : vector<256x256xf32> to vector<256xf32>
    %20 = vector.shape_cast %19 : vector<256xf32> to vector<256x1xf32>
    %21 = tpu.reciprocal %20 {approx = true} : vector<256x1xf32> -> vector<256x1xf32>
    %22 = vector.broadcast %13 : f32 to vector<256x1xf32>
    %23 = arith.mulf %21, %22 : vector<256x1xf32>
    %c1 = arith.constant 1 : index
    %24 = memref.load %arg2[%c1] : memref<2xf32, #tpu.memory_space<smem>>
    %cst_14 = arith.constant dense<0xFF800000> : vector<256xf32>
    %25 = vector.multi_reduction <maximumf>, %12, %cst_14 [1] : vector<256x256xf32> to vector<256xf32>
    %26 = vector.shape_cast %25 : vector<256xf32> to vector<256x1xf32>
    %27 = vector.broadcast %26 : vector<256x1xf32> to vector<256x256xf32>
    %28 = arith.subf %12, %27 : vector<256x256xf32>
    %29 = math.exp %28 : vector<256x256xf32>
    %cst_15 = arith.constant dense<0.000000e+00> : vector<256xf32>
    %30 = vector.multi_reduction <add>, %29, %cst_15 [1] : vector<256x256xf32> to vector<256xf32>
    %31 = vector.shape_cast %30 : vector<256xf32> to vector<256x1xf32>
    %32 = tpu.reciprocal %31 {approx = true} : vector<256x1xf32> -> vector<256x1xf32>
    %33 = vector.broadcast %24 : f32 to vector<256x1xf32>
    %34 = arith.mulf %32, %33 : vector<256x1xf32>
    %35 = vector.broadcast %23 : vector<256x1xf32> to vector<256x256xf32>
    %36 = arith.mulf %18, %35 : vector<256x256xf32>
    %37 = vector.broadcast %34 : vector<256x1xf32> to vector<256x256xf32>
    %38 = arith.mulf %29, %37 : vector<256x256xf32>
    %39 = arith.addf %36, %38 : vector<256x256xf32>
    %c0_16 = arith.constant 0 : index
    %c0_17 = arith.constant 0 : index
    %40 = vector.load %arg12[%c0_16, %c0_17] : memref<4x256xbf16, #tpu.memory_space<vmem>>, vector<4x256xbf16>
    %41 = arith.truncf %39 : vector<256x256xf32> to vector<256x256xbf16>
    %cst_18 = arith.constant dense<0.000000e+00> : vector<4x256xf32>
    %42 = tpu.matmul %40, %41, %cst_18 {dimension_numbers = #tpu.dot_dimension_numbers<[1], [1], [0], [0], [0, 0, 1, 0], [], []>} : vector<4x256xbf16>, vector<256x256xbf16>, vector<4x256xf32> -> vector<4x256xf32>
    %43 = arith.addf %4, %42 : vector<4x256xf32>
    %c0_19 = arith.constant 0 : index
    %c0_20 = arith.constant 0 : index
    %c0_21 = arith.constant 0 : index
    %44 = vector.load %arg9[%c0_19, %c0_20, %c0_21] : memref<1x4x256xf32, #tpu.memory_space<vmem>>, vector<1x4x256xf32>
    %45 = vector.shape_cast %44 : vector<1x4x256xf32> to vector<4x256xf32>
    %46 = vector.shape_cast %43 : vector<4x256xf32> to vector<1x4x256xf32>
    tpu.vector_store %arg9[%c0_19, %c0_20, %c0_21], %46 {strides = array<i32>} : memref<1x4x256xf32, #tpu.memory_space<vmem>>, vector<1x4x256xf32>,
    return
  }
  func.func @transform_0(%arg0: i32, %arg1: i32) -> i32 {
    %c0_i32 = arith.constant 0 : i32
    %c0_i32_0 = arith.constant 0 : i32
    return %c0_i32 : i32
  }
  func.func @transform_1(%arg0: i32, %arg1: i32) -> (i32, i32, i32) {
    %c0_i32 = arith.constant 0 : i32
    %c0_i32_0 = arith.constant 0 : i32
    return %arg0, %c0_i32, %arg1 : i32, i32, i32
  }
  func.func @transform_2(%arg0: i32, %arg1: i32) -> (i32, i32, i32) {
    %c0_i32 = arith.constant 0 : i32
    %c0_i32_0 = arith.constant 0 : i32
    %c0_i32_1 = arith.constant 0 : i32
    return %arg0, %c0_i32, %c0_i32_0 : i32, i32, i32
  }
  func.func @transform_3(%arg0: i32, %arg1: i32) -> (i32, i32, i32) {
    %c0_i32 = arith.constant 0 : i32
    %c0_i32_0 = arith.constant 0 : i32
    %c0_i32_1 = arith.constant 0 : i32
    return %arg0, %c0_i32, %c0_i32_0 : i32, i32, i32
  }
  func.func @transform_4(%arg0: i32, %arg1: i32) -> (i32, i32) {
    %c0_i32 = arith.constant 0 : i32
    %c0_i32_0 = arith.constant 0 : i32
    %c0_i32_1 = arith.constant 0 : i32
    return %c0_i32, %c0_i32_0 : i32, i32
  }
  func.func @transform_5(%arg0: i32, %arg1: i32) -> (i32, i32) {
    %c0_i32 = arith.constant 0 : i32
    %c0_i32_0 = arith.constant 0 : i32
    %c0_i32_1 = arith.constant 0 : i32
    return %c0_i32, %c0_i32_0 : i32, i32
  }
  func.func @transform_6(%arg0: i32, %arg1: i32) -> (i32, i32) {
    %c0_i32 = arith.constant 0 : i32
    %c0_i32_0 = arith.constant 0 : i32
    %c0_i32_1 = arith.constant 0 : i32
    return %c0_i32, %c0_i32_0 : i32, i32
  }
  func.func @transform_7(%arg0: i32, %arg1: i32) -> (i32, i32, i32) {
    %c0_i32 = arith.constant 0 : i32
    %c0_i32_0 = arith.constant 0 : i32
    return %arg0, %c0_i32, %arg1 : i32, i32, i32
  }
}

</mosaic_0001>

<llo_original>
// kernel: tpu_custom_call.1
$region0: #{tpu_custom_call.1}
  #allocation0 [shape = 'u32[]', space=smem, size = 0x4, offset = 0x4, fixed_abs, tag = 'smem constant byte address 0x4 - core index']
  #allocation1 [shape = 'u32[72,128]{1,0:T(1,128)}', space=vmem, size = 0x9000, scoped, tag = 'internal scratch']
  #allocation2 [shape = 'bf16[4,256]{1,0:T(4,128)(2,1)}', space=vmem, size = 0x800, scoped, tag = 'scratch operand']
  #allocation3 [shape = 'bf16[4,256]{1,0:T(4,128)(2,1)}', space=vmem, size = 0x800, scoped, tag = 'scratch operand']
  #allocation4 [shape = 'bf16[4,256]{1,0:T(4,128)(2,1)}', space=vmem, size = 0x800, scoped, tag = 'scratch operand']
  %s0 = inlined_call_operand.vmem [shape: f32[2], index: 0, kind: input, shape index: {}]
  %s1 = inlined_call_operand.hbm [shape: f32[2,4,256], index: 1, kind: input, shape index: {}]
  %s2 = inlined_call_operand.hbm [shape: f32[2,4,256], index: 2, kind: input, shape index: {}]
  %s3 = inlined_call_operand.hbm [shape: f32[2,4,256], index: 3, kind: input, shape index: {}]
  %s4 = inlined_call_operand.vmem [shape: f32[4,4], index: 4, kind: input, shape index: {}]
  %s5 = inlined_call_operand.vmem [shape: f32[4,4], index: 5, kind: input, shape index: {}]
  %s6 = inlined_call_operand.vmem [shape: f32[8,4], index: 6, kind: input, shape index: {}]
  %s7 = inlined_call_operand.hbm [shape: f32[2,4,256], index: 7, kind: output, shape index: {}]
  %s8 = sld [smem:[#allocation0]]
  $region81: #{tpu_custom_call.1} parent=0
    _
  %s10 = ssub.s32 1, %s8
  %s11 = scalar_select 0, %s10, %s8
  $region1: #{tpu_custom_call.1} parent=0
    #allocation5 [shape = 'u8[512]{0}', space=smem, size = 0x200, scoped, tag = 'input window, operand 0, single buffered']
    #allocation6 [shape = 's32[2]{0}', space=sflag, size = 0x8, scoped, tag = 'scoped memory for tpu_custom_call.1']
    #allocation7 [shape = 's32[2]{0}', space=sflag, size = 0x8, scoped, tag = 'scoped memory for tpu_custom_call.1']
    #allocation8 [shape = 's32[2]{0}', space=sflag, size = 0x8, scoped, tag = 'scoped memory for tpu_custom_call.1']
    #allocation9 [shape = 'u8[8192]{0}', space=vmem, size = 0x2000, scoped, tag = 'input window, operand 1']
    #allocation10 [shape = 'u8[8192]{0}', space=vmem, size = 0x2000, scoped, tag = 'input window, operand 2']
    #allocation11 [shape = 's32[2]{0}', space=sflag, size = 0x8, scoped, tag = 'scoped memory for tpu_custom_call.1']
    #allocation12 [shape = 'u8[8192]{0}', space=vmem, size = 0x2000, scoped, tag = 'input window, operand 3']
    #allocation13 [shape = 'u8[8192]{0}', space=vmem, size = 0x2000, scoped, tag = 'output window, operand 0']
    %12 = vsyncpa [#allocation8], 0
    %13 = vsyncpa [#allocation6], 0
    %s14 = scalar_lea.sflag [#allocation6], 1
    %15 = vsyncpa %s14, 0
    %16 = vsyncpa [#allocation11], 0
    %s17 = scalar_lea.sflag [#allocation11], 1
    %18 = vsyncpa %s17, 0
    %19 = vsyncpa [#allocation7], 0
    %s20 = scalar_lea.sflag [#allocation7], 1
    %21 = vsyncpa %s20, 0
    loop: start=0, step=1, limit=4
    $region2: #{tpu_custom_call.1} parent=1 // loop_pre_header
      _
    $region3: #{tpu_custom_call.1} parent=1 // loop_header
      %s23 = sphi 0, %s27
      %p24 = scmp.ge.s32.totalorder %s23, 4
      %s30 = sphi 0, %s42
      %s31 = sphi 0, %s38
      %s32 = sphi 0, %s30
      %s33 = sphi 0, %s31
      %s34 = sphi 0, %s32
      %s35 = sphi 0, %s33
      %s43 = sphi 0, %s43
      %s45 = sphi 0, %s43
      %s46 = sphi 0, %s45
      %s60 = sphi 0, %s46
      %s68 = sphi 0, %s70
      %s71 = sphi 0, %s68
      %s72 = sphi 0, %s71
      %s88 = sphi 0, %s72
      %s94 = sphi 0, %s96
      %s97 = sphi 0, %s94
      %s98 = sphi 0, %s97
      %s114 = sphi 0, %s98
      %s120 = sphi 0, %s122
      %s123 = sphi 0, %s120
      %s124 = sphi 0, %s123
      %s140 = sphi 0, %s124
      %s144 = sphi 0, %s144
      %s146 = sphi 0, %s144
      %s147 = sphi 0, %s146
      %s161 = sphi 0, %s147
      %s165 = sphi 0, %s165
      %s167 = sphi 0, %s165
      %s168 = sphi 0, %s167
      %s182 = sphi 0, %s168
      %s186 = sphi 0, %s186
      %s188 = sphi 0, %s186
      %s189 = sphi 0, %s188
      %s203 = sphi 0, %s189
      %s211 = sphi 0, %s213
      %s214 = sphi 0, %s211
      %s215 = sphi 0, %s214
      %s231 = sphi 0, %s215
    $region4: #{tpu_custom_call.1} parent=1 // loop_header_branch
      %26 = sbr.rel (%p24) target = $region8
    $region5: #{tpu_custom_call.1} parent=1 // loop_body
      %s28 = ssub.s32 %s23, 1
      %s29 = ssub.s32 %s23, 2
      %s36 = sadd.s32 1, %s31
      %p37 = scmp.ge.s32.totalorder %s36, 1
      %s38 = scalar_select %p37, 0, %s36
      %s39 = sadd.s32 1, %s30
      %s40 = scalar_select %p37, %s39, %s30
      %p41 = scmp.ge.s32.totalorder %s40, 2
      %s42 = scalar_select %p41, 0, %s40
      %s44 = sadd.s32 %s43, 1
      %p47 = scmp.eq.s32.totalorder %s23, 1
      %p48 = scmp.ne.s32.totalorder %s43, %s45
      %p49 = scmp.eq.s32.totalorder %s23, 0
      %p50 = por %p48, %p49
      %p51 = scmp.ne.s32.totalorder %s43, %s45
      %p52 = scmp.eq.s32.totalorder %s28, 1
      %p53 = por %p51, %p52
      %p54 = scmp.ne.s32.totalorder %s45, %s46
      %p55 = scmp.eq.s32.totalorder %s28, 0
      %p56 = por %p54, %p55
      %p57 = scmp.ne.s32.totalorder %s45, %s46
      %p58 = scmp.eq.s32.totalorder %s29, 1
      %p59 = por %p57, %p58
      %p61 = scmp.ne.s32.totalorder %s46, %s60
      %p62 = scmp.eq.s32.totalorder %s29, 0
      %p63 = por %p61, %p62
      %s64 = ssub.s32 %s30, %s42
      %s65 = ssub.s32 %s31, %s38
      %s66 = sor.u32 %s64, %s65
      %p67 = scmp.eq.s32.totalorder %s66, 0
      %s69 = sadd.s32 %s68, 1
      %s70 = scalar_select %p67, %s68, %s69
      %p73 = pneg %p67
      %p74 = scmp.eq.s32.totalorder %s23, 1
      %p75 = por %p73, %p74
      %p76 = scmp.ne.s32.totalorder %s68, %s71
      %p77 = scmp.eq.s32.totalorder %s23, 0
      %p78 = por %p76, %p77
      %p79 = scmp.ne.s32.totalorder %s68, %s71
      %p80 = scmp.eq.s32.totalorder %s28, 1
      %p81 = por %p79, %p80
      %p82 = scmp.ne.s32.totalorder %s71, %s72
      %p83 = scmp.eq.s32.totalorder %s28, 0
      %p84 = por %p82, %p83
      %p85 = scmp.ne.s32.totalorder %s71, %s72
      %p86 = scmp.eq.s32.totalorder %s29, 1
      %p87 = por %p85, %p86
      %p89 = scmp.ne.s32.totalorder %s72, %s88
      %p90 = scmp.eq.s32.totalorder %s29, 0
      %p91 = por %p89, %p90
      %s92 = ssub.s32 %s30, %s42
      %p93 = scmp.eq.s32.totalorder %s92, 0
      %s95 = sadd.s32 %s94, 1
      %s96 = scalar_select %p93, %s94, %s95
      %p99 = pneg %p93
      %p100 = scmp.eq.s32.totalorder %s23, 1
      %p101 = por %p99, %p100
      %p102 = scmp.ne.s32.totalorder %s94, %s97
      %p103 = scmp.eq.s32.totalorder %s23, 0
      %p104 = por %p102, %p103
      %p105 = scmp.ne.s32.totalorder %s94, %s97
      %p106 = scmp.eq.s32.totalorder %s28, 1
      %p107 = por %p105, %p106
      %p108 = scmp.ne.s32.totalorder %s97, %s98
      %p109 = scmp.eq.s32.totalorder %s28, 0
      %p110 = por %p108, %p109
      %p111 = scmp.ne.s32.totalorder %s97, %s98
      %p112 = scmp.eq.s32.totalorder %s29, 1
      %p113 = por %p111, %p112
      %p115 = scmp.ne.s32.totalorder %s98, %s114
      %p116 = scmp.eq.s32.totalorder %s29, 0
      %p117 = por %p115, %p116
      %s118 = ssub.s32 %s30, %s42
      %p119 = scmp.eq.s32.totalorder %s118, 0
      %s121 = sadd.s32 %s120, 1
      %s122 = scalar_select %p119, %s120, %s121
      %p125 = pneg %p119
      %p126 = scmp.eq.s32.totalorder %s23, 1
      %p127 = por %p125, %p126
      %p128 = scmp.ne.s32.totalorder %s120, %s123
      %p129 = scmp.eq.s32.totalorder %s23, 0
      %p130 = por %p128, %p129
      %p131 = scmp.ne.s32.totalorder %s120, %s123
      %p132 = scmp.eq.s32.totalorder %s28, 1
      %p133 = por %p131, %p132
      %p134 = scmp.ne.s32.totalorder %s123, %s124
      %p135 = scmp.eq.s32.totalorder %s28, 0
      %p136 = por %p134, %p135
      %p137 = scmp.ne.s32.totalorder %s123, %s124
      %p138 = scmp.eq.s32.totalorder %s29, 1
      %p139 = por %p137, %p138
      %p141 = scmp.ne.s32.totalorder %s124, %s140
      %p142 = scmp.eq.s32.totalorder %s29, 0
      %p143 = por %p141, %p142
      %s145 = sadd.s32 %s144, 1
      %p148 = scmp.eq.s32.totalorder %s23, 1
      %p149 = scmp.ne.s32.totalorder %s144, %s146
      %p150 = scmp.eq.s32.totalorder %s23, 0
      %p151 = por %p149, %p150
      %p152 = scmp.ne.s32.totalorder %s144, %s146
      %p153 = scmp.eq.s32.totalorder %s28, 1
      %p154 = por %p152, %p153
      %p155 = scmp.ne.s32.totalorder %s146, %s147
      %p156 = scmp.eq.s32.totalorder %s28, 0
      %p157 = por %p155, %p156
      %p158 = scmp.ne.s32.totalorder %s146, %s147
      %p159 = scmp.eq.s32.totalorder %s29, 1
      %p160 = por %p158, %p159
      %p162 = scmp.ne.s32.totalorder %s147, %s161
      %p163 = scmp.eq.s32.totalorder %s29, 0
      %p164 = por %p162, %p163
      %s166 = sadd.s32 %s165, 1
      %p169 = scmp.eq.s32.totalorder %s23, 1
      %p170 = scmp.ne.s32.totalorder %s165, %s167
      %p171 = scmp.eq.s32.totalorder %s23, 0
      %p172 = por %p170, %p171
      %p173 = scmp.ne.s32.totalorder %s165, %s167
      %p174 = scmp.eq.s32.totalorder %s28, 1
      %p175 = por %p173, %p174
      %p176 = scmp.ne.s32.totalorder %s167, %s168
      %p177 = scmp.eq.s32.totalorder %s28, 0
      %p178 = por %p176, %p177
      %p179 = scmp.ne.s32.totalorder %s167, %s168
      %p180 = scmp.eq.s32.totalorder %s29, 1
      %p181 = por %p179, %p180
      %p183 = scmp.ne.s32.totalorder %s168, %s182
      %p184 = scmp.eq.s32.totalorder %s29, 0
      %p185 = por %p183, %p184
      %s187 = sadd.s32 %s186, 1
      %p190 = scmp.eq.s32.totalorder %s23, 1
      %p191 = scmp.ne.s32.totalorder %s186, %s188
      %p192 = scmp.eq.s32.totalorder %s23, 0
      %p193 = por %p191, %p192
      %p194 = scmp.ne.s32.totalorder %s186, %s188
      %p195 = scmp.eq.s32.totalorder %s28, 1
      %p196 = por %p194, %p195
      %p197 = scmp.ne.s32.totalorder %s188, %s189
      %p198 = scmp.eq.s32.totalorder %s28, 0
      %p199 = por %p197, %p198
      %p200 = scmp.ne.s32.totalorder %s188, %s189
      %p201 = scmp.eq.s32.totalorder %s29, 1
      %p202 = por %p200, %p201
      %p204 = scmp.ne.s32.totalorder %s189, %s203
      %p205 = scmp.eq.s32.totalorder %s29, 0
      %p206 = por %p204, %p205
      %s207 = ssub.s32 %s30, %s42
      %s208 = ssub.s32 %s31, %s38
      %s209 = sor.u32 %s207, %s208
      %p210 = scmp.eq.s32.totalorder %s209, 0
      %s212 = sadd.s32 %s211, 1
      %s213 = scalar_select %p210, %s211, %s212
      %p216 = pneg %p210
      %p217 = scmp.eq.s32.totalorder %s23, 1
      %p218 = por %p216, %p217
      %p219 = scmp.ne.s32.totalorder %s211, %s214
      %p220 = scmp.eq.s32.totalorder %s23, 0
      %p221 = por %p219, %p220
      %p222 = scmp.ne.s32.totalorder %s211, %s214
      %p223 = scmp.eq.s32.totalorder %s28, 1
      %p224 = por %p222, %p223
      %p225 = scmp.ne.s32.totalorder %s214, %s215
      %p226 = scmp.eq.s32.totalorder %s28, 0
      %p227 = por %p225, %p226
      %p228 = scmp.ne.s32.totalorder %s214, %s215
      %p229 = scmp.eq.s32.totalorder %s29, 1
      %p230 = por %p228, %p229
      %p232 = scmp.ne.s32.totalorder %s215, %s231
      %p233 = scmp.eq.s32.totalorder %s29, 0
      %p234 = por %p232, %p233
      %p235 = scmp.le.s32.totalorder 1, %s23
      %p236 = scmp.lt.s32.totalorder %s23, 3
      %p237 = pnand %p235, %p236
      %p238 = pneg %p237
      // Predicated region
      $region9: #{tpu_custom_call.1} parent=5 // pred_check
        _
      $region10: #{tpu_custom_call.1} parent=5 // pred_check_branch
        %240 = sbr.rel (%p237) target = $region12
      $region11: #{tpu_custom_call.1} parent=5 // pred_region
        %s241 = ssub.s32 %s23, 1
        // Predicated region
        $region13: #{tpu_custom_call.1} parent=11 // pred_check
          %p242 = pneg %p56
        $region14: #{tpu_custom_call.1} parent=11 // pred_check_branch
          %244 = sbr.rel (%p242) target = $region16
        $region15: #{tpu_custom_call.1} parent=11 // pred_region
          %246 = vsyncadd [#allocation8], 0
          %s248 = sshll.u32 %s0, 4
          %s249 = int_to_ptr.vmem [resolvable:$true] %s248
          %251 = dma.vmem_to_smem %s249, 16, [#allocation5], [#allocation8]
        $region16: #{tpu_custom_call.1} parent=11 // pred_fallthru
          _
        // Predicated region
        $region17: #{tpu_custom_call.1} parent=11 // pred_check
          %p252 = pneg %p157
        $region18: #{tpu_custom_call.1} parent=11 // pred_check_branch
          %254 = sbr.rel (%p252) target = $region20
        $region19: #{tpu_custom_call.1} parent=11 // pred_region
          _
        $region20: #{tpu_custom_call.1} parent=11 // pred_fallthru
          _
        // Predicated region
        $region21: #{tpu_custom_call.1} parent=11 // pred_check
          %p255 = pneg %p178
        $region22: #{tpu_custom_call.1} parent=11 // pred_check_branch
          %257 = sbr.rel (%p255) target = $region24
        $region23: #{tpu_custom_call.1} parent=11 // pred_region
          _
        $region24: #{tpu_custom_call.1} parent=11 // pred_fallthru
          _
        // Predicated region
        $region25: #{tpu_custom_call.1} parent=11 // pred_check
          %p258 = pneg %p199
        $region26: #{tpu_custom_call.1} parent=11 // pred_check_branch
          %260 = sbr.rel (%p258) target = $region28
        $region27: #{tpu_custom_call.1} parent=11 // pred_region
          _
        $region28: #{tpu_custom_call.1} parent=11 // pred_fallthru
          _
      $region12: #{tpu_custom_call.1} parent=5 // pred_fallthru
        _
      %p261 = scmp.lt.s32.totalorder %s23, 2
      // Predicated region
      $region29: #{tpu_custom_call.1} parent=5 // pred_check
        %p262 = pneg %p261
      $region30: #{tpu_custom_call.1} parent=5 // pred_check_branch
        %264 = sbr.rel (%p262) target = $region32
      $region31: #{tpu_custom_call.1} parent=5 // pred_region
        // Predicated region
        $region33: #{tpu_custom_call.1} parent=31 // pred_check
          %p265 = pneg %p78
        $region34: #{tpu_custom_call.1} parent=31 // pred_check_branch
          %267 = sbr.rel (%p265) target = $region36
        $region35: #{tpu_custom_call.1} parent=31 // pred_region
          %s268 = sand.u32 %s68, 1
          %s269 = scalar_lea.sflag [#allocation6], %s268
          %s270 = sand.u32 %s68, 1
          %s271 = smul.addr %s270, 8
          %s272 = scalar_lea.vmem [#allocation9], %s271
          %s273 = smul.u32 2, %s31
          %275 = vsyncadd %s269, 0
          %s276 = smul.addr %s30, 2
          %s277 = sadd.s32 %s273, %s276
          %s278 = smul.addr %s277, 4
          %s279 = scalar_lea.hbm %s1, %s278
          %s281 = sshll.u32 %s279, 4
          %s282 = int_to_ptr.hbm [resolvable:$true] %s281
          %s283 = sshll.u32 %s272, 4
          %s284 = int_to_ptr.vmem [resolvable:$true] %s283
          %286 = dma.hbm_to_vmem [thread:$0]  %s282, 128, %s284, %s269
        $region36: #{tpu_custom_call.1} parent=31 // pred_fallthru
          _
        // Predicated region
        $region37: #{tpu_custom_call.1} parent=31 // pred_check
          %p287 = pneg %p104
        $region38: #{tpu_custom_call.1} parent=31 // pred_check_branch
          %289 = sbr.rel (%p287) target = $region40
        $region39: #{tpu_custom_call.1} parent=31 // pred_region
          %s290 = sand.u32 %s23, 1
          %s291 = scalar_lea.sflag [#allocation11], %s290
          %s292 = sand.u32 %s94, 1
          %s293 = smul.addr %s292, 8
          %s294 = scalar_lea.vmem [#allocation10], %s293
          %296 = vsyncadd %s291, 0
          %s297 = smul.addr %s30, 2
          %s298 = smul.addr %s297, 4
          %s299 = scalar_lea.hbm %s2, %s298
          %s301 = sshll.u32 %s299, 4
          %s302 = int_to_ptr.hbm [resolvable:$true] %s301
          %s303 = sshll.u32 %s294, 4
          %s304 = int_to_ptr.vmem [resolvable:$true] %s303
          %306 = dma.hbm_to_vmem [thread:$0]  %s302, 128, %s304, %s291
        $region40: #{tpu_custom_call.1} parent=31 // pred_fallthru
          _
        // Predicated region
        $region41: #{tpu_custom_call.1} parent=31 // pred_check
          %p307 = pneg %p130
        $region42: #{tpu_custom_call.1} parent=31 // pred_check_branch
          %309 = sbr.rel (%p307) target = $region44
        $region43: #{tpu_custom_call.1} parent=31 // pred_region
          %s310 = sand.u32 %s23, 1
          %s311 = scalar_lea.sflag [#allocation11], %s310
          %s312 = sand.u32 %s120, 1
          %s313 = smul.addr %s312, 8
          %s314 = scalar_lea.vmem [#allocation12], %s313
          %316 = vsyncadd %s311, 0
          %s317 = smul.addr %s30, 2
          %s318 = smul.addr %s317, 4
          %s319 = scalar_lea.hbm %s3, %s318
          %s321 = sshll.u32 %s319, 4
          %s322 = int_to_ptr.hbm [resolvable:$true] %s321
          %s323 = sshll.u32 %s314, 4
          %s324 = int_to_ptr.vmem [resolvable:$true] %s323
          %326 = dma.hbm_to_vmem [thread:$0]  %s322, 128, %s324, %s311
        $region44: #{tpu_custom_call.1} parent=31 // pred_fallthru
          _
      $region32: #{tpu_custom_call.1} parent=5 // pred_fallthru
        _
      %p327 = scmp.le.s32.totalorder 1, %s23
      %p328 = scmp.lt.s32.totalorder %s23, 3
      %p329 = pnand %p327, %p328
      %p330 = pneg %p329
      // Predicated region
      $region45: #{tpu_custom_call.1} parent=5 // pred_check
        _
      $region46: #{tpu_custom_call.1} parent=5 // pred_check_branch
        %332 = sbr.rel (%p329) target = $region48
      $region47: #{tpu_custom_call.1} parent=5 // pred_region
        %s333 = ssub.s32 %s23, 1
        // Predicated region
        $region49: #{tpu_custom_call.1} parent=47 // pred_check
          %p334 = pneg %p56
        $region50: #{tpu_custom_call.1} parent=47 // pred_check_branch
          %336 = sbr.rel (%p334) target = $region52
        $region51: #{tpu_custom_call.1} parent=47 // pred_region
          %338 = dma.done [#allocation8], 16
        $region52: #{tpu_custom_call.1} parent=47 // pred_fallthru
          _
        %s339 = sand.u32 %s71, 1
        %s340 = scalar_lea.sflag [#allocation6], %s339
        %s341 = sand.u32 %s71, 1
        %s342 = smul.addr %s341, 8
        %s343 = scalar_lea.vmem [#allocation9], %s342
        // Predicated region
        $region53: #{tpu_custom_call.1} parent=47 // pred_check
          %p344 = pneg %p84
        $region54: #{tpu_custom_call.1} parent=47 // pred_check_branch
          %346 = sbr.rel (%p344) target = $region56
        $region55: #{tpu_custom_call.1} parent=47 // pred_region
          %348 = dma.done %s340, 128
        $region56: #{tpu_custom_call.1} parent=47 // pred_fallthru
          _
        %s349 = sand.u32 %s28, 1
        %s350 = scalar_lea.sflag [#allocation11], %s349
        %s351 = sand.u32 %s97, 1
        %s352 = smul.addr %s351, 8
        %s353 = scalar_lea.vmem [#allocation10], %s352
        // Predicated region
        $region57: #{tpu_custom_call.1} parent=47 // pred_check
          %p354 = pneg %p110
        $region58: #{tpu_custom_call.1} parent=47 // pred_check_branch
          %356 = sbr.rel (%p354) target = $region60
        $region59: #{tpu_custom_call.1} parent=47 // pred_region
          %358 = dma.done %s350, 128
        $region60: #{tpu_custom_call.1} parent=47 // pred_fallthru
          _
        %s359 = sand.u32 %s28, 1
        %s360 = scalar_lea.sflag [#allocation11], %s359
        %s361 = sand.u32 %s123, 1
        %s362 = smul.addr %s361, 8
        %s363 = scalar_lea.vmem [#allocation12], %s362
        // Predicated region
        $region61: #{tpu_custom_call.1} parent=47 // pred_check
          %p364 = pneg %p136
        $region62: #{tpu_custom_call.1} parent=47 // pred_check_branch
          %366 = sbr.rel (%p364) target = $region64
        $region63: #{tpu_custom_call.1} parent=47 // pred_region
          %368 = dma.done %s360, 128
        $region64: #{tpu_custom_call.1} parent=47 // pred_fallthru
          _
        %369 = sfence
        %p370 = pneg %p56
        %p371 = pneg %p53
        %s372 = sand.u32 %s71, 1
        %s373 = scalar_lea.sflag [#allocation6], %s372
        %s374 = sand.u32 %s71, 1
        %s375 = smul.addr %s374, 8
        %s376 = scalar_lea.vmem [#allocation9], %s375
        %p377 = pneg %p84
        %p378 = pneg %p81
        %s379 = sand.u32 %s28, 1
        %s380 = scalar_lea.sflag [#allocation11], %s379
        %s381 = sand.u32 %s97, 1
        %s382 = smul.addr %s381, 8
        %s383 = scalar_lea.vmem [#allocation10], %s382
        %p384 = pneg %p110
        %p385 = pneg %p107
        %s386 = sand.u32 %s28, 1
        %s387 = scalar_lea.sflag [#allocation11], %s386
        %s388 = sand.u32 %s123, 1
        %s389 = smul.addr %s388, 8
        %s390 = scalar_lea.vmem [#allocation12], %s389
        %p391 = pneg %p136
        %p392 = pneg %p133
        %p393 = pneg %p157
        %p394 = pneg %p154
        %p395 = pneg %p178
        %p396 = pneg %p175
        %p397 = pneg %p199
        %p398 = pneg %p196
        %p399 = pneg %p227
        %p400 = pneg %p224
        %s401 = sand.u32 %s214, 1
        %s402 = scalar_lea.sflag [#allocation7], %s401
        %s403 = sand.u32 %s214, 1
        %s404 = smul.addr %s403, 8
        %s405 = scalar_lea.vmem [#allocation13], %s404
        %s406 = smul.u32 2, %s33
        %s407 = smul.u32 2, %s33
        %p409 = scmp.eq.s32.totalorder %s33, 0
        // Predicated region
        $region65: #{tpu_custom_call.1} parent=47 // pred_check
          %p410 = pneg %p409
        $region66: #{tpu_custom_call.1} parent=47 // pred_check_branch
          %412 = sbr.rel (%p410) target = $region68
        $region67: #{tpu_custom_call.1} parent=47 // pred_region
          %v413 = vld [vmem:[%s353] sm:$0xff]
          %v414 = vld [vmem:[%s363] sm:$0xff]
          %v415 = vld [vmem:[%s5] sm:$0xf]
          %417 = vst [vmem:[#allocation1] ss:$2 sm:$0xff] %v413
          %v418 = vld.sshfl [vmem:[#allocation1] sm:$0xff pattern:$0x75316420]
          %v419 = vld.sshfl [vmem:[#allocation1 + $0x8] sm:$0xff pattern:$0x75316420]
          %vm420 = vcmask 31744
          %v422 = vsel %vm420, %v415, 0
          %vm424 = vcmask 1043456
          %v425 = vsel %vm424, %v418, 0
          %v427 = vsel %vm424, %v419, 0
          %429 = vmatpush.msra.mxu0 0.0
          %430 = vmatpush.msra.mxu0 0.0
          %431 = vmatpush.msra.mxu0 0.0
          %432 = vmatpush.msra.mxu0 0.0
          %433 = vmatpush.msra.mxu0 0.0
          %434 = vmatpush.msra.mxu0 0.0
          %435 = vmatpush.msra.mxu0 0.0
          %436 = vmatpush.msra.mxu0 0.0
          %437 = vmatpush.msra.mxu0 0.0
          %438 = vmatpush.msra.mxu0 0.0
          %439 = vmatpush.msra.mxu0 0.0
          %440 = vmatpush.msra.mxu0 0.0
          %441 = vmatpush.msra.mxu0 0.0
          %442 = vmatpush.msra.mxu0 0.0
          %443 = vmatpush.msra.mxu0 0.0
          %444 = vmatpush.msra.mxu0 %v425
          %445 = vmatmul.f32.gmra.mxu0 %v422
          %v446 = vpop.f32.mrf.mxu0
          %v447 = vadd.f32 0.0, %v446
          %448 = vdwg.mxu0
          %449 = vmatpush.msra.mxu0 0.0
          %450 = vmatpush.msra.mxu0 0.0
          %451 = vmatpush.msra.mxu0 0.0
          %452 = vmatpush.msra.mxu0 0.0
          %453 = vmatpush.msra.mxu0 0.0
          %454 = vmatpush.msra.mxu0 0.0
          %455 = vmatpush.msra.mxu0 0.0
          %456 = vmatpush.msra.mxu0 0.0
          %457 = vmatpush.msra.mxu0 0.0
          %458 = vmatpush.msra.mxu0 0.0
          %459 = vmatpush.msra.mxu0 0.0
          %460 = vmatpush.msra.mxu0 0.0
          %461 = vmatpush.msra.mxu0 0.0
          %462 = vmatpush.msra.mxu0 0.0
          %463 = vmatpush.msra.mxu0 0.0
          %464 = vmatpush.msra.mxu0 %v427
          %465 = vmatmul.f32.gmra.mxu0 %v422
          %v466 = vpop.f32.mrf.mxu0
          %v467 = vadd.f32 0.0, %v466
          %468 = vdwg.mxu0
          %v469 = vld [vmem:[%s6] sm:$0xff]
          %471 = vst [vmem:[#allocation1] ss:$2 sm:$0xff] %v414
          %v472 = vld.sshfl [vmem:[#allocation1] sm:$0xff pattern:$0x75316420]
          %v473 = vld.sshfl [vmem:[#allocation1 + $0x8] sm:$0xff pattern:$0x75316420]
          %v475 = vsel %vm420, %v469, 0
          %v477 = vsel %vm424, %v472, 0
          %v479 = vsel %vm424, %v473, 0
          %481 = vmatpush.msra.mxu0 0.0
          %482 = vmatpush.msra.mxu0 0.0
          %483 = vmatpush.msra.mxu0 0.0
          %484 = vmatpush.msra.mxu0 0.0
          %485 = vmatpush.msra.mxu0 0.0
          %486 = vmatpush.msra.mxu0 0.0
          %487 = vmatpush.msra.mxu0 0.0
          %488 = vmatpush.msra.mxu0 0.0
          %489 = vmatpush.msra.mxu0 0.0
          %490 = vmatpush.msra.mxu0 0.0
          %491 = vmatpush.msra.mxu0 0.0
          %492 = vmatpush.msra.mxu0 0.0
          %493 = vmatpush.msra.mxu0 0.0
          %494 = vmatpush.msra.mxu0 0.0
          %495 = vmatpush.msra.mxu0 0.0
          %496 = vmatpush.msra.mxu0 %v477
          %497 = vmatmul.f32.gmra.mxu0 %v475
          %v498 = vpop.f32.mrf.mxu0
          %v499 = vadd.f32 0.0, %v498
          %500 = vdwg.mxu0
          %501 = vmatpush.msra.mxu0 0.0
          %502 = vmatpush.msra.mxu0 0.0
          %503 = vmatpush.msra.mxu0 0.0
          %504 = vmatpush.msra.mxu0 0.0
          %505 = vmatpush.msra.mxu0 0.0
          %506 = vmatpush.msra.mxu0 0.0
          %507 = vmatpush.msra.mxu0 0.0
          %508 = vmatpush.msra.mxu0 0.0
          %509 = vmatpush.msra.mxu0 0.0
          %510 = vmatpush.msra.mxu0 0.0
          %511 = vmatpush.msra.mxu0 0.0
          %512 = vmatpush.msra.mxu0 0.0
          %513 = vmatpush.msra.mxu0 0.0
          %514 = vmatpush.msra.mxu0 0.0
          %515 = vmatpush.msra.mxu0 0.0
          %516 = vmatpush.msra.mxu0 %v479
          %517 = vmatmul.f32.gmra.mxu0 %v475
          %v518 = vpop.f32.mrf.mxu0
          %v519 = vadd.f32 0.0, %v518
          %520 = vdwg.mxu0
          %v521 = vpack.c.bf16 %v519, %v499
          %v523 = vrot.slane %v521, 2
          %vm524 = vcmask 1041408
          %v527 = vsel %vm524, %v521, %v523
          %529 = vst [vmem:[#allocation2] sm:$0xf] %v527
          %530 = vst.sshfl [vmem:[#allocation1] sm:$0xff pattern:$0x75643120] %v521
          %s531 = scalar_lea.vmem [#allocation1], 1
          %v532 = vld [vmem:[%s531] ss:$2 sm:$0xff]
          %534 = vst [vmem:[#allocation4] sm:$0xf] %v532
          %v535 = vpack.c.bf16 %v467, %v447
          %v537 = vrot.slane %v535, 2
          %v540 = vsel %vm524, %v535, %v537
          %542 = vst [vmem:[#allocation3] sm:$0xf] %v540
        $region68: #{tpu_custom_call.1} parent=47 // pred_fallthru
          _
        %v543 = vld [vmem:[%s343] sm:$0xff]
        %v544 = vld [vmem:[%s4] sm:$0xf]
        %546 = vst [vmem:[#allocation1] ss:$2 sm:$0xff] %v543
        %v547 = vld.sshfl [vmem:[#allocation1] sm:$0xff pattern:$0x75316420]
        %v548 = vld.sshfl [vmem:[#allocation1 + $0x8] sm:$0xff pattern:$0x75316420]
        %vm549 = vcmask 31744
        %v551 = vsel %vm549, %v544, 0
        %vm553 = vcmask 1043456
        %v554 = vsel %vm553, %v547, 0
        %v556 = vsel %vm553, %v548, 0
        %558 = vmatpush.msra.mxu0 0.0
        %559 = vmatpush.msra.mxu0 0.0
        %560 = vmatpush.msra.mxu0 0.0
        %561 = vmatpush.msra.mxu0 0.0
        %562 = vmatpush.msra.mxu0 0.0
        %563 = vmatpush.msra.mxu0 0.0
        %564 = vmatpush.msra.mxu0 0.0
        %565 = vmatpush.msra.mxu0 0.0
        %566 = vmatpush.msra.mxu0 0.0
        %567 = vmatpush.msra.mxu0 0.0
        %568 = vmatpush.msra.mxu0 0.0
        %569 = vmatpush.msra.mxu0 0.0
        %570 = vmatpush.msra.mxu0 0.0
        %571 = vmatpush.msra.mxu0 0.0
        %572 = vmatpush.msra.mxu0 0.0
        %573 = vmatpush.msra.mxu0 %v554
        %574 = vmatmul.f32.gmra.mxu0 %v551
        %v575 = vpop.f32.mrf.mxu0
        %v576 = vadd.f32 0.0, %v575
        %577 = vdwg.mxu0
        %578 = vmatpush.msra.mxu0 0.0
        %579 = vmatpush.msra.mxu0 0.0
        %580 = vmatpush.msra.mxu0 0.0
        %581 = vmatpush.msra.mxu0 0.0
        %582 = vmatpush.msra.mxu0 0.0
        %583 = vmatpush.msra.mxu0 0.0
        %584 = vmatpush.msra.mxu0 0.0
        %585 = vmatpush.msra.mxu0 0.0
        %586 = vmatpush.msra.mxu0 0.0
        %587 = vmatpush.msra.mxu0 0.0
        %588 = vmatpush.msra.mxu0 0.0
        %589 = vmatpush.msra.mxu0 0.0
        %590 = vmatpush.msra.mxu0 0.0
        %591 = vmatpush.msra.mxu0 0.0
        %592 = vmatpush.msra.mxu0 0.0
        %593 = vmatpush.msra.mxu0 %v556
        %594 = vmatmul.f32.gmra.mxu0 %v551
        %v595 = vpop.f32.mrf.mxu0
        %v596 = vadd.f32 0.0, %v595
        %597 = vdwg.mxu0
        %598 = vxpose.xlu0.b32.start [1/16] %v576, 128
        %599 = vxpose.xlu0.b32.cont [2/16] 0.0, 128
        %600 = vxpose.xlu0.b32.cont [3/16] 0.0, 128
        %601 = vxpose.xlu0.b32.cont [4/16] 0.0, 128
        %602 = vxpose.xlu0.b32.cont [5/16] 0.0, 128
        %603 = vxpose.xlu0.b32.cont [6/16] 0.0, 128
        %604 = vxpose.xlu0.b32.cont [7/16] 0.0, 128
        %605 = vxpose.xlu0.b32.cont [8/16] 0.0, 128
        %606 = vxpose.xlu0.b32.cont [9/16] 0.0, 128
        %607 = vxpose.xlu0.b32.cont [10/16] 0.0, 128
        %608 = vxpose.xlu0.b32.cont [11/16] 0.0, 128
        %609 = vxpose.xlu0.b32.cont [12/16] 0.0, 128
        %610 = vxpose.xlu0.b32.cont [13/16] 0.0, 128
        %611 = vxpose.xlu0.b32.cont [14/16] 0.0, 128
        %612 = vxpose.xlu0.b32.cont [15/16] 0.0, 128
        %613 = vxpose.xlu0.b32.end [16/16] 0.0, 128
        %v614 = vpop.trf.xlu0
        %v615 = vpop.trf.xlu0
        %v616 = vpop.trf.xlu0
        %v617 = vpop.trf.xlu0
        %v618 = vpop.trf.xlu0
        %v619 = vpop.trf.xlu0
        %v620 = vpop.trf.xlu0
        %v621 = vpop.trf.xlu0
        %v622 = vpop.trf.xlu0
        %v623 = vpop.trf.xlu0
        %v624 = vpop.trf.xlu0
        %v625 = vpop.trf.xlu0
        %v626 = vpop.trf.xlu0
        %v627 = vpop.trf.xlu0
        %v628 = vpop.trf.xlu0
        %v629 = vpop.trf.xlu0
        %630 = vxpose.xlu0.b32.start [1/16] %v596, 128
        %631 = vxpose.xlu0.b32.cont [2/16] 0.0, 128
        %632 = vxpose.xlu0.b32.cont [3/16] 0.0, 128
        %633 = vxpose.xlu0.b32.cont [4/16] 0.0, 128
        %634 = vxpose.xlu0.b32.cont [5/16] 0.0, 128
        %635 = vxpose.xlu0.b32.cont [6/16] 0.0, 128
        %636 = vxpose.xlu0.b32.cont [7/16] 0.0, 128
        %637 = vxpose.xlu0.b32.cont [8/16] 0.0, 128
        %638 = vxpose.xlu0.b32.cont [9/16] 0.0, 128
        %639 = vxpose.xlu0.b32.cont [10/16] 0.0, 128
        %640 = vxpose.xlu0.b32.cont [11/16] 0.0, 128
        %641 = vxpose.xlu0.b32.cont [12/16] 0.0, 128
        %642 = vxpose.xlu0.b32.cont [13/16] 0.0, 128
        %643 = vxpose.xlu0.b32.cont [14/16] 0.0, 128
        %644 = vxpose.xlu0.b32.cont [15/16] 0.0, 128
        %645 = vxpose.xlu0.b32.end [16/16] 0.0, 128
        %v646 = vpop.trf.xlu0
        %v647 = vpop.trf.xlu0
        %v648 = vpop.trf.xlu0
        %v649 = vpop.trf.xlu0
        %v650 = vpop.trf.xlu0
        %v651 = vpop.trf.xlu0
        %v652 = vpop.trf.xlu0
        %v653 = vpop.trf.xlu0
        %v654 = vpop.trf.xlu0
        %v655 = vpop.trf.xlu0
        %v656 = vpop.trf.xlu0
        %v657 = vpop.trf.xlu0
        %v658 = vpop.trf.xlu0
        %v659 = vpop.trf.xlu0
        %v660 = vpop.trf.xlu0
        %v661 = vpop.trf.xlu0
        %v662 = vpack.c.bf16 %v615, %v614
        %v663 = vpack.c.bf16 %v617, %v616
        %v664 = vpack.c.bf16 %v619, %v618
        %v665 = vpack.c.bf16 %v621, %v620
        %v666 = vpack.c.bf16 %v623, %v622
        %v667 = vpack.c.bf16 %v625, %v624
        %v668 = vpack.c.bf16 %v627, %v626
        %v669 = vpack.c.bf16 %v629, %v628
        %v670 = vpack.c.bf16 %v647, %v646
        %v671 = vpack.c.bf16 %v649, %v648
        %v672 = vpack.c.bf16 %v651, %v650
        %v673 = vpack.c.bf16 %v653, %v652
        %v674 = vpack.c.bf16 %v655, %v654
        %v675 = vpack.c.bf16 %v657, %v656
        %v676 = vpack.c.bf16 %v659, %v658
        %v677 = vpack.c.bf16 %v661, %v660
        %v678 = vld [vmem:[#allocation2] sm:$0xf]
        %680 = vst [vmem:[#allocation1] ss:$4 sm:$0xff] %v678
        %v681 = vld.sshfl [vmem:[#allocation1] sm:$0xff pattern:$0x73625140]
        %v682 = vld.sshfl [vmem:[#allocation1 + $0x8] sm:$0xff pattern:$0x73625140]
        %v684 = vsel %vm549, %v662, 0
        %v687 = vsel %vm549, %v663, 0
        %v690 = vsel %vm549, %v664, 0
        %v693 = vsel %vm549, %v665, 0
        %v696 = vsel %vm549, %v666, 0
        %v699 = vsel %vm549, %v667, 0
        %v702 = vsel %vm549, %v668, 0
        %v705 = vsel %vm549, %v669, 0
        %v708 = vsel %vm549, %v670, 0
        %v711 = vsel %vm549, %v671, 0
        %v714 = vsel %vm549, %v672, 0
        %v717 = vsel %vm549, %v673, 0
        %v720 = vsel %vm549, %v674, 0
        %v723 = vsel %vm549, %v675, 0
        %v726 = vsel %vm549, %v676, 0
        %v729 = vsel %vm549, %v677, 0
        %vm731 = vcmask 1041408
        %v732 = vsel %vm731, %v681, 0
        %v734 = vsel %vm731, %v682, 0
        %736 = vmatpush.bf16.msra.mxu0 0
        %737 = vmatpush.bf16.msra.mxu0 0
        %738 = vmatpush.bf16.msra.mxu0 0
        %739 = vmatpush.bf16.msra.mxu0 0
        %740 = vmatpush.bf16.msra.mxu0 0
        %741 = vmatpush.bf16.msra.mxu0 0
        %742 = vmatpush.bf16.msra.mxu0 0
        %743 = vmatpush.bf16.msra.mxu0 %v732
        %744 = vmatmul.bf16.gmra.mxu0 %v684
        %v745 = vpop.f32.mrf.mxu0
        %v746 = vadd.f32 0.0, %v745
        %v747 = vpop.f32.mrf.mxu0
        %v748 = vadd.f32 0.0, %v747
        %749 = vmatmul.bf16.gmra.mxu0 %v687
        %v750 = vpop.f32.mrf.mxu0
        %v751 = vadd.f32 0.0, %v750
        %v752 = vpop.f32.mrf.mxu0
        %v753 = vadd.f32 0.0, %v752
        %754 = vmatmul.bf16.gmra.mxu0 %v690
        %v755 = vpop.f32.mrf.mxu0
        %v756 = vadd.f32 0.0, %v755
        %v757 = vpop.f32.mrf.mxu0
        %v758 = vadd.f32 0.0, %v757
        %759 = vmatmul.bf16.gmra.mxu0 %v693
        %v760 = vpop.f32.mrf.mxu0
        %v761 = vadd.f32 0.0, %v760
        %v762 = vpop.f32.mrf.mxu0
        %v763 = vadd.f32 0.0, %v762
        %764 = vmatmul.bf16.gmra.mxu0 %v696
        %v765 = vpop.f32.mrf.mxu0
        %v766 = vadd.f32 0.0, %v765
        %v767 = vpop.f32.mrf.mxu0
        %v768 = vadd.f32 0.0, %v767
        %769 = vmatmul.bf16.gmra.mxu0 %v699
        %v770 = vpop.f32.mrf.mxu0
        %v771 = vadd.f32 0.0, %v770
        %v772 = vpop.f32.mrf.mxu0
        %v773 = vadd.f32 0.0, %v772
        %774 = vmatmul.bf16.gmra.mxu0 %v702
        %v775 = vpop.f32.mrf.mxu0
        %v776 = vadd.f32 0.0, %v775
        %v777 = vpop.f32.mrf.mxu0
        %v778 = vadd.f32 0.0, %v777
        %779 = vmatmul.bf16.gmra.mxu0 %v705
        %v780 = vpop.f32.mrf.mxu0
        %v781 = vadd.f32 0.0, %v780
        %v782 = vpop.f32.mrf.mxu0
        %v783 = vadd.f32 0.0, %v782
        %784 = vmatmul.bf16.gmra.mxu0 %v708
        %v785 = vpop.f32.mrf.mxu0
        %v786 = vadd.f32 0.0, %v785
        %v787 = vpop.f32.mrf.mxu0
        %v788 = vadd.f32 0.0, %v787
        %789 = vmatmul.bf16.gmra.mxu0 %v711
        %v790 = vpop.f32.mrf.mxu0
        %v791 = vadd.f32 0.0, %v790
        %v792 = vpop.f32.mrf.mxu0
        %v793 = vadd.f32 0.0, %v792
        %794 = vmatmul.bf16.gmra.mxu0 %v714
        %v795 = vpop.f32.mrf.mxu0
        %v796 = vadd.f32 0.0, %v795
        %v797 = vpop.f32.mrf.mxu0
        %v798 = vadd.f32 0.0, %v797
        %799 = vmatmul.bf16.gmra.mxu0 %v717
        %v800 = vpop.f32.mrf.mxu0
        %v801 = vadd.f32 0.0, %v800
        %v802 = vpop.f32.mrf.mxu0
        %v803 = vadd.f32 0.0, %v802
        %804 = vmatmul.bf16.gmra.mxu0 %v720
        %v805 = vpop.f32.mrf.mxu0
        %v806 = vadd.f32 0.0, %v805
        %v807 = vpop.f32.mrf.mxu0
        %v808 = vadd.f32 0.0, %v807
        %809 = vmatmul.bf16.gmra.mxu0 %v723
        %v810 = vpop.f32.mrf.mxu0
        %v811 = vadd.f32 0.0, %v810
        %v812 = vpop.f32.mrf.mxu0
        %v813 = vadd.f32 0.0, %v812
        %814 = vmatmul.bf16.gmra.mxu0 %v726
        %v815 = vpop.f32.mrf.mxu0
        %v816 = vadd.f32 0.0, %v815
        %v817 = vpop.f32.mrf.mxu0
        %v818 = vadd.f32 0.0, %v817
        %819 = vmatmul.bf16.gmra.mxu0 %v729
        %v820 = vpop.f32.mrf.mxu0
        %v821 = vadd.f32 0.0, %v820
        %v822 = vpop.f32.mrf.mxu0
        %v823 = vadd.f32 0.0, %v822
        %824 = vdwg.mxu0
        %825 = vmatpush.bf16.msra.mxu0 0
        %826 = vmatpush.bf16.msra.mxu0 0
        %827 = vmatpush.bf16.msra.mxu0 0
        %828 = vmatpush.bf16.msra.mxu0 0
        %829 = vmatpush.bf16.msra.mxu0 0
        %830 = vmatpush.bf16.msra.mxu0 0
        %831 = vmatpush.bf16.msra.mxu0 0
        %832 = vmatpush.bf16.msra.mxu0 %v734
        %833 = vmatmul.bf16.gmra.mxu0 %v684
        %v834 = vpop.f32.mrf.mxu0
        %v835 = vadd.f32 0.0, %v834
        %v836 = vpop.f32.mrf.mxu0
        %v837 = vadd.f32 0.0, %v836
        %838 = vmatmul.bf16.gmra.mxu0 %v687
        %v839 = vpop.f32.mrf.mxu0
        %v840 = vadd.f32 0.0, %v839
        %v841 = vpop.f32.mrf.mxu0
        %v842 = vadd.f32 0.0, %v841
        %843 = vmatmul.bf16.gmra.mxu0 %v690
        %v844 = vpop.f32.mrf.mxu0
        %v845 = vadd.f32 0.0, %v844
        %v846 = vpop.f32.mrf.mxu0
        %v847 = vadd.f32 0.0, %v846
        %848 = vmatmul.bf16.gmra.mxu0 %v693
        %v849 = vpop.f32.mrf.mxu0
        %v850 = vadd.f32 0.0, %v849
        %v851 = vpop.f32.mrf.mxu0
        %v852 = vadd.f32 0.0, %v851
        %853 = vmatmul.bf16.gmra.mxu0 %v696
        %v854 = vpop.f32.mrf.mxu0
        %v855 = vadd.f32 0.0, %v854
        %v856 = vpop.f32.mrf.mxu0
        %v857 = vadd.f32 0.0, %v856
        %858 = vmatmul.bf16.gmra.mxu0 %v699
        %v859 = vpop.f32.mrf.mxu0
        %v860 = vadd.f32 0.0, %v859
        %v861 = vpop.f32.mrf.mxu0
        %v862 = vadd.f32 0.0, %v861
        %863 = vmatmul.bf16.gmra.mxu0 %v702
        %v864 = vpop.f32.mrf.mxu0
        %v865 = vadd.f32 0.0, %v864
        %v866 = vpop.f32.mrf.mxu0
        %v867 = vadd.f32 0.0, %v866
        %868 = vmatmul.bf16.gmra.mxu0 %v705
        %v869 = vpop.f32.mrf.mxu0
        %v870 = vadd.f32 0.0, %v869
        %v871 = vpop.f32.mrf.mxu0
        %v872 = vadd.f32 0.0, %v871
        %873 = vmatmul.bf16.gmra.mxu0 %v708
        %v874 = vpop.f32.mrf.mxu0
        %v875 = vadd.f32 0.0, %v874
        %v876 = vpop.f32.mrf.mxu0
        %v877 = vadd.f32 0.0, %v876
        %878 = vmatmul.bf16.gmra.mxu0 %v711
        %v879 = vpop.f32.mrf.mxu0
        %v880 = vadd.f32 0.0, %v879
        %v881 = vpop.f32.mrf.mxu0
        %v882 = vadd.f32 0.0, %v881
        %883 = vmatmul.bf16.gmra.mxu0 %v714
        %v884 = vpop.f32.mrf.mxu0
        %v885 = vadd.f32 0.0, %v884
        %v886 = vpop.f32.mrf.mxu0
        %v887 = vadd.f32 0.0, %v886
        %888 = vmatmul.bf16.gmra.mxu0 %v717
        %v889 = vpop.f32.mrf.mxu0
        %v890 = vadd.f32 0.0, %v889
        %v891 = vpop.f32.mrf.mxu0
        %v892 = vadd.f32 0.0, %v891
        %893 = vmatmul.bf16.gmra.mxu0 %v720
        %v894 = vpop.f32.mrf.mxu0
        %v895 = vadd.f32 0.0, %v894
        %v896 = vpop.f32.mrf.mxu0
        %v897 = vadd.f32 0.0, %v896
        %898 = vmatmul.bf16.gmra.mxu0 %v723
        %v899 = vpop.f32.mrf.mxu0
        %v900 = vadd.f32 0.0, %v899
        %v901 = vpop.f32.mrf.mxu0
        %v902 = vadd.f32 0.0, %v901
        %903 = vmatmul.bf16.gmra.mxu0 %v726
        %v904 = vpop.f32.mrf.mxu0
        %v905 = vadd.f32 0.0, %v904
        %v906 = vpop.f32.mrf.mxu0
        %v907 = vadd.f32 0.0, %v906
        %908 = vmatmul.bf16.gmra.mxu0 %v729
        %v909 = vpop.f32.mrf.mxu0
        %v910 = vadd.f32 0.0, %v909
        %v911 = vpop.f32.mrf.mxu0
        %v912 = vadd.f32 0.0, %v911
        %913 = vdwg.mxu0
        %v914 = vld [vmem:[#allocation3] sm:$0xf]
        %916 = vst [vmem:[#allocation1] ss:$4 sm:$0xff] %v914
        %v917 = vld.sshfl [vmem:[#allocation1] sm:$0xff pattern:$0x73625140]
        %v918 = vld.sshfl [vmem:[#allocation1 + $0x8] sm:$0xff pattern:$0x73625140]
        %v919 = vsel %vm731, %v917, 0
        %v921 = vsel %vm731, %v918, 0
        %923 = vmatpush.bf16.msra.mxu0 0
        %924 = vmatpush.bf16.msra.mxu0 0
        %925 = vmatpush.bf16.msra.mxu0 0
        %926 = vmatpush.bf16.msra.mxu0 0
        %927 = vmatpush.bf16.msra.mxu0 0
        %928 = vmatpush.bf16.msra.mxu0 0
        %929 = vmatpush.bf16.msra.mxu0 0
        %930 = vmatpush.bf16.msra.mxu0 %v919
        %931 = vmatmul.bf16.gmra.mxu0 %v684
        %v932 = vpop.f32.mrf.mxu0
        %v933 = vadd.f32 0.0, %v932
        %v934 = vpop.f32.mrf.mxu0
        %v935 = vadd.f32 0.0, %v934
        %936 = vmatmul.bf16.gmra.mxu0 %v687
        %v937 = vpop.f32.mrf.mxu0
        %v938 = vadd.f32 0.0, %v937
        %v939 = vpop.f32.mrf.mxu0
        %v940 = vadd.f32 0.0, %v939
        %941 = vmatmul.bf16.gmra.mxu0 %v690
        %v942 = vpop.f32.mrf.mxu0
        %v943 = vadd.f32 0.0, %v942
        %v944 = vpop.f32.mrf.mxu0
        %v945 = vadd.f32 0.0, %v944
        %946 = vmatmul.bf16.gmra.mxu0 %v693
        %v947 = vpop.f32.mrf.mxu0
        %v948 = vadd.f32 0.0, %v947
        %v949 = vpop.f32.mrf.mxu0
        %v950 = vadd.f32 0.0, %v949
        %951 = vmatmul.bf16.gmra.mxu0 %v696
        %v952 = vpop.f32.mrf.mxu0
        %v953 = vadd.f32 0.0, %v952
        %v954 = vpop.f32.mrf.mxu0
        %v955 = vadd.f32 0.0, %v954
        %956 = vmatmul.bf16.gmra.mxu0 %v699
        %v957 = vpop.f32.mrf.mxu0
        %v958 = vadd.f32 0.0, %v957
        %v959 = vpop.f32.mrf.mxu0
        %v960 = vadd.f32 0.0, %v959
        %961 = vmatmul.bf16.gmra.mxu0 %v702
        %v962 = vpop.f32.mrf.mxu0
        %v963 = vadd.f32 0.0, %v962
        %v964 = vpop.f32.mrf.mxu0
        %v965 = vadd.f32 0.0, %v964
        %966 = vmatmul.bf16.gmra.mxu0 %v705
        %v967 = vpop.f32.mrf.mxu0
        %v968 = vadd.f32 0.0, %v967
        %v969 = vpop.f32.mrf.mxu0
        %v970 = vadd.f32 0.0, %v969
        %971 = vmatmul.bf16.gmra.mxu0 %v708
        %v972 = vpop.f32.mrf.mxu0
        %v973 = vadd.f32 0.0, %v972
        %v974 = vpop.f32.mrf.mxu0
        %v975 = vadd.f32 0.0, %v974
        %976 = vmatmul.bf16.gmra.mxu0 %v711
        %v977 = vpop.f32.mrf.mxu0
        %v978 = vadd.f32 0.0, %v977
        %v979 = vpop.f32.mrf.mxu0
        %v980 = vadd.f32 0.0, %v979
        %981 = vmatmul.bf16.gmra.mxu0 %v714
        %v982 = vpop.f32.mrf.mxu0
        %v983 = vadd.f32 0.0, %v982
        %v984 = vpop.f32.mrf.mxu0
        %v985 = vadd.f32 0.0, %v984
        %986 = vmatmul.bf16.gmra.mxu0 %v717
        %v987 = vpop.f32.mrf.mxu0
        %v988 = vadd.f32 0.0, %v987
        %v989 = vpop.f32.mrf.mxu0
        %v990 = vadd.f32 0.0, %v989
        %991 = vmatmul.bf16.gmra.mxu0 %v720
        %v992 = vpop.f32.mrf.mxu0
        %v993 = vadd.f32 0.0, %v992
        %v994 = vpop.f32.mrf.mxu0
        %v995 = vadd.f32 0.0, %v994
        %996 = vmatmul.bf16.gmra.mxu0 %v723
        %v997 = vpop.f32.mrf.mxu0
        %v998 = vadd.f32 0.0, %v997
        %v999 = vpop.f32.mrf.mxu0
        %v1000 = vadd.f32 0.0, %v999
        %1001 = vmatmul.bf16.gmra.mxu0 %v726
        %v1002 = vpop.f32.mrf.mxu0
        %v1003 = vadd.f32 0.0, %v1002
        %v1004 = vpop.f32.mrf.mxu0
        %v1005 = vadd.f32 0.0, %v1004
        %1006 = vmatmul.bf16.gmra.mxu0 %v729
        %v1007 = vpop.f32.mrf.mxu0
        %v1008 = vadd.f32 0.0, %v1007
        %v1009 = vpop.f32.mrf.mxu0
        %v1010 = vadd.f32 0.0, %v1009
        %1011 = vdwg.mxu0
        %1012 = vmatpush.bf16.msra.mxu0 0
        %1013 = vmatpush.bf16.msra.mxu0 0
        %1014 = vmatpush.bf16.msra.mxu0 0
        %1015 = vmatpush.bf16.msra.mxu0 0
        %1016 = vmatpush.bf16.msra.mxu0 0
        %1017 = vmatpush.bf16.msra.mxu0 0
        %1018 = vmatpush.bf16.msra.mxu0 0
        %1019 = vmatpush.bf16.msra.mxu0 %v921
        %1020 = vmatmul.bf16.gmra.mxu0 %v684
        %v1021 = vpop.f32.mrf.mxu0
        %v1022 = vadd.f32 0.0, %v1021
        %v1023 = vpop.f32.mrf.mxu0
        %v1024 = vadd.f32 0.0, %v1023
        %1025 = vmatmul.bf16.gmra.mxu0 %v687
        %v1026 = vpop.f32.mrf.mxu0
        %v1027 = vadd.f32 0.0, %v1026
        %v1028 = vpop.f32.mrf.mxu0
        %v1029 = vadd.f32 0.0, %v1028
        %1030 = vmatmul.bf16.gmra.mxu0 %v690
        %v1031 = vpop.f32.mrf.mxu0
        %v1032 = vadd.f32 0.0, %v1031
        %v1033 = vpop.f32.mrf.mxu0
        %v1034 = vadd.f32 0.0, %v1033
        %1035 = vmatmul.bf16.gmra.mxu0 %v693
        %v1036 = vpop.f32.mrf.mxu0
        %v1037 = vadd.f32 0.0, %v1036
        %v1038 = vpop.f32.mrf.mxu0
        %v1039 = vadd.f32 0.0, %v1038
        %1040 = vmatmul.bf16.gmra.mxu0 %v696
        %v1041 = vpop.f32.mrf.mxu0
        %v1042 = vadd.f32 0.0, %v1041
        %v1043 = vpop.f32.mrf.mxu0
        %v1044 = vadd.f32 0.0, %v1043
        %1045 = vmatmul.bf16.gmra.mxu0 %v699
        %v1046 = vpop.f32.mrf.mxu0
        %v1047 = vadd.f32 0.0, %v1046
        %v1048 = vpop.f32.mrf.mxu0
        %v1049 = vadd.f32 0.0, %v1048
        %1050 = vmatmul.bf16.gmra.mxu0 %v702
        %v1051 = vpop.f32.mrf.mxu0
        %v1052 = vadd.f32 0.0, %v1051
        %v1053 = vpop.f32.mrf.mxu0
        %v1054 = vadd.f32 0.0, %v1053
        %1055 = vmatmul.bf16.gmra.mxu0 %v705
        %v1056 = vpop.f32.mrf.mxu0
        %v1057 = vadd.f32 0.0, %v1056
        %v1058 = vpop.f32.mrf.mxu0
        %v1059 = vadd.f32 0.0, %v1058
        %1060 = vmatmul.bf16.gmra.mxu0 %v708
        %v1061 = vpop.f32.mrf.mxu0
        %v1062 = vadd.f32 0.0, %v1061
        %v1063 = vpop.f32.mrf.mxu0
        %v1064 = vadd.f32 0.0, %v1063
        %1065 = vmatmul.bf16.gmra.mxu0 %v711
        %v1066 = vpop.f32.mrf.mxu0
        %v1067 = vadd.f32 0.0, %v1066
        %v1068 = vpop.f32.mrf.mxu0
        %v1069 = vadd.f32 0.0, %v1068
        %1070 = vmatmul.bf16.gmra.mxu0 %v714
        %v1071 = vpop.f32.mrf.mxu0
        %v1072 = vadd.f32 0.0, %v1071
        %v1073 = vpop.f32.mrf.mxu0
        %v1074 = vadd.f32 0.0, %v1073
        %1075 = vmatmul.bf16.gmra.mxu0 %v717
        %v1076 = vpop.f32.mrf.mxu0
        %v1077 = vadd.f32 0.0, %v1076
        %v1078 = vpop.f32.mrf.mxu0
        %v1079 = vadd.f32 0.0, %v1078
        %1080 = vmatmul.bf16.gmra.mxu0 %v720
        %v1081 = vpop.f32.mrf.mxu0
        %v1082 = vadd.f32 0.0, %v1081
        %v1083 = vpop.f32.mrf.mxu0
        %v1084 = vadd.f32 0.0, %v1083
        %1085 = vmatmul.bf16.gmra.mxu0 %v723
        %v1086 = vpop.f32.mrf.mxu0
        %v1087 = vadd.f32 0.0, %v1086
        %v1088 = vpop.f32.mrf.mxu0
        %v1089 = vadd.f32 0.0, %v1088
        %1090 = vmatmul.bf16.gmra.mxu0 %v726
        %v1091 = vpop.f32.mrf.mxu0
        %v1092 = vadd.f32 0.0, %v1091
        %v1093 = vpop.f32.mrf.mxu0
        %v1094 = vadd.f32 0.0, %v1093
        %1095 = vmatmul.bf16.gmra.mxu0 %v729
        %v1096 = vpop.f32.mrf.mxu0
        %v1097 = vadd.f32 0.0, %v1096
        %v1098 = vpop.f32.mrf.mxu0
        %v1099 = vadd.f32 0.0, %v1098
        %1100 = vdwg.mxu0
        %s1101 = sld [smem:[#allocation5]]
        %v1102 = vmax.f32 %v746, %v835
        %1103 = vmax.xlane.f32.xlu0 %v1102
        %v1104 = vpop.xlane.xlu0 %1103
        %v1105 = vmax.f32 %v748, %v837
        %1106 = vmax.xlane.f32.xlu0 %v1105
        %v1107 = vpop.xlane.xlu0 %1106
        %v1108 = vmax.f32 %v751, %v840
        %1109 = vmax.xlane.f32.xlu0 %v1108
        %v1110 = vpop.xlane.xlu0 %1109
        %v1111 = vmax.f32 %v753, %v842
        %1112 = vmax.xlane.f32.xlu0 %v1111
        %v1113 = vpop.xlane.xlu0 %1112
        %v1114 = vmax.f32 %v756, %v845
        %1115 = vmax.xlane.f32.xlu0 %v1114
        %v1116 = vpop.xlane.xlu0 %1115
        %v1117 = vmax.f32 %v758, %v847
        %1118 = vmax.xlane.f32.xlu0 %v1117
        %v1119 = vpop.xlane.xlu0 %1118
        %v1120 = vmax.f32 %v761, %v850
        %1121 = vmax.xlane.f32.xlu0 %v1120
        %v1122 = vpop.xlane.xlu0 %1121
        %v1123 = vmax.f32 %v763, %v852
        %1124 = vmax.xlane.f32.xlu0 %v1123
        %v1125 = vpop.xlane.xlu0 %1124
        %v1126 = vmax.f32 %v766, %v855
        %1127 = vmax.xlane.f32.xlu0 %v1126
        %v1128 = vpop.xlane.xlu0 %1127
        %v1129 = vmax.f32 %v768, %v857
        %1130 = vmax.xlane.f32.xlu0 %v1129
        %v1131 = vpop.xlane.xlu0 %1130
        %v1132 = vmax.f32 %v771, %v860
        %1133 = vmax.xlane.f32.xlu0 %v1132
        %v1134 = vpop.xlane.xlu0 %1133
        %v1135 = vmax.f32 %v773, %v862
        %1136 = vmax.xlane.f32.xlu0 %v1135
        %v1137 = vpop.xlane.xlu0 %1136
        %v1138 = vmax.f32 %v776, %v865
        %1139 = vmax.xlane.f32.xlu0 %v1138
        %v1140 = vpop.xlane.xlu0 %1139
        %v1141 = vmax.f32 %v778, %v867
        %1142 = vmax.xlane.f32.xlu0 %v1141
        %v1143 = vpop.xlane.xlu0 %1142
        %v1144 = vmax.f32 %v781, %v870
        %1145 = vmax.xlane.f32.xlu0 %v1144
        %v1146 = vpop.xlane.xlu0 %1145
        %v1147 = vmax.f32 %v783, %v872
        %1148 = vmax.xlane.f32.xlu0 %v1147
        %v1149 = vpop.xlane.xlu0 %1148
        %v1150 = vmax.f32 %v786, %v875
        %1151 = vmax.xlane.f32.xlu0 %v1150
        %v1152 = vpop.xlane.xlu0 %1151
        %v1153 = vmax.f32 %v788, %v877
        %1154 = vmax.xlane.f32.xlu0 %v1153
        %v1155 = vpop.xlane.xlu0 %1154
        %v1156 = vmax.f32 %v791, %v880
        %1157 = vmax.xlane.f32.xlu0 %v1156
        %v1158 = vpop.xlane.xlu0 %1157
        %v1159 = vmax.f32 %v793, %v882
        %1160 = vmax.xlane.f32.xlu0 %v1159
        %v1161 = vpop.xlane.xlu0 %1160
        %v1162 = vmax.f32 %v796, %v885
        %1163 = vmax.xlane.f32.xlu0 %v1162
        %v1164 = vpop.xlane.xlu0 %1163
        %v1165 = vmax.f32 %v798, %v887
        %1166 = vmax.xlane.f32.xlu0 %v1165
        %v1167 = vpop.xlane.xlu0 %1166
        %v1168 = vmax.f32 %v801, %v890
        %1169 = vmax.xlane.f32.xlu0 %v1168
        %v1170 = vpop.xlane.xlu0 %1169
        %v1171 = vmax.f32 %v803, %v892
        %1172 = vmax.xlane.f32.xlu0 %v1171
        %v1173 = vpop.xlane.xlu0 %1172
        %v1174 = vmax.f32 %v806, %v895
        %1175 = vmax.xlane.f32.xlu0 %v1174
        %v1176 = vpop.xlane.xlu0 %1175
        %v1177 = vmax.f32 %v808, %v897
        %1178 = vmax.xlane.f32.xlu0 %v1177
        %v1179 = vpop.xlane.xlu0 %1178
        %v1180 = vmax.f32 %v811, %v900
        %1181 = vmax.xlane.f32.xlu0 %v1180
        %v1182 = vpop.xlane.xlu0 %1181
        %v1183 = vmax.f32 %v813, %v902
        %1184 = vmax.xlane.f32.xlu0 %v1183
        %v1185 = vpop.xlane.xlu0 %1184
        %v1186 = vmax.f32 %v816, %v905
        %1187 = vmax.xlane.f32.xlu0 %v1186
        %v1188 = vpop.xlane.xlu0 %1187
        %v1189 = vmax.f32 %v818, %v907
        %1190 = vmax.xlane.f32.xlu0 %v1189
        %v1191 = vpop.xlane.xlu0 %1190
        %v1192 = vmax.f32 %v821, %v910
        %1193 = vmax.xlane.f32.xlu0 %v1192
        %v1194 = vpop.xlane.xlu0 %1193
        %v1195 = vmax.f32 %v823, %v912
        %1196 = vmax.xlane.f32.xlu0 %v1195
        %v1197 = vpop.xlane.xlu0 %1196
        %v1198 = vsub.f32 %v746, %v1104
        %v1199 = vsub.f32 %v835, %v1104
        %v1200 = vsub.f32 %v748, %v1107
        %v1201 = vsub.f32 %v837, %v1107
        %v1202 = vsub.f32 %v751, %v1110
        %v1203 = vsub.f32 %v840, %v1110
        %v1204 = vsub.f32 %v753, %v1113
        %v1205 = vsub.f32 %v842, %v1113
        %v1206 = vsub.f32 %v756, %v1116
        %v1207 = vsub.f32 %v845, %v1116
        %v1208 = vsub.f32 %v758, %v1119
        %v1209 = vsub.f32 %v847, %v1119
        %v1210 = vsub.f32 %v761, %v1122
        %v1211 = vsub.f32 %v850, %v1122
        %v1212 = vsub.f32 %v763, %v1125
        %v1213 = vsub.f32 %v852, %v1125
        %v1214 = vsub.f32 %v766, %v1128
        %v1215 = vsub.f32 %v855, %v1128
        %v1216 = vsub.f32 %v768, %v1131
        %v1217 = vsub.f32 %v857, %v1131
        %v1218 = vsub.f32 %v771, %v1134
        %v1219 = vsub.f32 %v860, %v1134
        %v1220 = vsub.f32 %v773, %v1137
        %v1221 = vsub.f32 %v862, %v1137
        %v1222 = vsub.f32 %v776, %v1140
        %v1223 = vsub.f32 %v865, %v1140
        %v1224 = vsub.f32 %v778, %v1143
        %v1225 = vsub.f32 %v867, %v1143
        %v1226 = vsub.f32 %v781, %v1146
        %v1227 = vsub.f32 %v870, %v1146
        %v1228 = vsub.f32 %v783, %v1149
        %v1229 = vsub.f32 %v872, %v1149
        %v1230 = vsub.f32 %v786, %v1152
        %v1231 = vsub.f32 %v875, %v1152
        %v1232 = vsub.f32 %v788, %v1155
        %v1233 = vsub.f32 %v877, %v1155
        %v1234 = vsub.f32 %v791, %v1158
        %v1235 = vsub.f32 %v880, %v1158
        %v1236 = vsub.f32 %v793, %v1161
        %v1237 = vsub.f32 %v882, %v1161
        %v1238 = vsub.f32 %v796, %v1164
        %v1239 = vsub.f32 %v885, %v1164
        %v1240 = vsub.f32 %v798, %v1167
        %v1241 = vsub.f32 %v887, %v1167
        %v1242 = vsub.f32 %v801, %v1170
        %v1243 = vsub.f32 %v890, %v1170
        %v1244 = vsub.f32 %v803, %v1173
        %v1245 = vsub.f32 %v892, %v1173
        %v1246 = vsub.f32 %v806, %v1176
        %v1247 = vsub.f32 %v895, %v1176
        %v1248 = vsub.f32 %v808, %v1179
        %v1249 = vsub.f32 %v897, %v1179
        %v1250 = vsub.f32 %v811, %v1182
        %v1251 = vsub.f32 %v900, %v1182
        %v1252 = vsub.f32 %v813, %v1185
        %v1253 = vsub.f32 %v902, %v1185
        %v1254 = vsub.f32 %v816, %v1188
        %v1255 = vsub.f32 %v905, %v1188
        %v1256 = vsub.f32 %v818, %v1191
        %v1257 = vsub.f32 %v907, %v1191
        %v1258 = vsub.f32 %v821, %v1194
        %v1259 = vsub.f32 %v910, %v1194
        %v1260 = vsub.f32 %v823, %v1197
        %v1261 = vsub.f32 %v912, %v1197
        %v1262 = vmul.f32 %v1198, 1.442695
        %v1263 = vpow.pop %v1262
        %v1264 = vmul.f32 %v1199, 1.442695
        %v1265 = vpow.pop %v1264
        %v1266 = vmul.f32 %v1200, 1.442695
        %v1267 = vpow.pop %v1266
        %v1268 = vmul.f32 %v1201, 1.442695
        %v1269 = vpow.pop %v1268
        %v1270 = vmul.f32 %v1202, 1.442695
        %v1271 = vpow.pop %v1270
        %v1272 = vmul.f32 %v1203, 1.442695
        %v1273 = vpow.pop %v1272
        %v1274 = vmul.f32 %v1204, 1.442695
        %v1275 = vpow.pop %v1274
        %v1276 = vmul.f32 %v1205, 1.442695
        %v1277 = vpow.pop %v1276
        %v1278 = vmul.f32 %v1206, 1.442695
        %v1279 = vpow.pop %v1278
        %v1280 = vmul.f32 %v1207, 1.442695
        %v1281 = vpow.pop %v1280
        %v1282 = vmul.f32 %v1208, 1.442695
        %v1283 = vpow.pop %v1282
        %v1284 = vmul.f32 %v1209, 1.442695
        %v1285 = vpow.pop %v1284
        %v1286 = vmul.f32 %v1210, 1.442695
        %v1287 = vpow.pop %v1286
        %v1288 = vmul.f32 %v1211, 1.442695
        %v1289 = vpow.pop %v1288
        %v1290 = vmul.f32 %v1212, 1.442695
        %v1291 = vpow.pop %v1290
        %v1292 = vmul.f32 %v1213, 1.442695
        %v1293 = vpow.pop %v1292
        %v1294 = vmul.f32 %v1214, 1.442695
        %v1295 = vpow.pop %v1294
        %v1296 = vmul.f32 %v1215, 1.442695
        %v1297 = vpow.pop %v1296
        %v1298 = vmul.f32 %v1216, 1.442695
        %v1299 = vpow.pop %v1298
        %v1300 = vmul.f32 %v1217, 1.442695
        %v1301 = vpow.pop %v1300
        %v1302 = vmul.f32 %v1218, 1.442695
        %v1303 = vpow.pop %v1302
        %v1304 = vmul.f32 %v1219, 1.442695
        %v1305 = vpow.pop %v1304
        %v1306 = vmul.f32 %v1220, 1.442695
        %v1307 = vpow.pop %v1306
        %v1308 = vmul.f32 %v1221, 1.442695
        %v1309 = vpow.pop %v1308
        %v1310 = vmul.f32 %v1222, 1.442695
        %v1311 = vpow.pop %v1310
        %v1312 = vmul.f32 %v1223, 1.442695
        %v1313 = vpow.pop %v1312
        %v1314 = vmul.f32 %v1224, 1.442695
        %v1315 = vpow.pop %v1314
        %v1316 = vmul.f32 %v1225, 1.442695
        %v1317 = vpow.pop %v1316
        %v1318 = vmul.f32 %v1226, 1.442695
        %v1319 = vpow.pop %v1318
        %v1320 = vmul.f32 %v1227, 1.442695
        %v1321 = vpow.pop %v1320
        %v1322 = vmul.f32 %v1228, 1.442695
        %v1323 = vpow.pop %v1322
        %v1324 = vmul.f32 %v1229, 1.442695
        %v1325 = vpow.pop %v1324
        %v1326 = vmul.f32 %v1230, 1.442695
        %v1327 = vpow.pop %v1326
        %v1328 = vmul.f32 %v1231, 1.442695
        %v1329 = vpow.pop %v1328
        %v1330 = vmul.f32 %v1232, 1.442695
        %v1331 = vpow.pop %v1330
        %v1332 = vmul.f32 %v1233, 1.442695
        %v1333 = vpow.pop %v1332
        %v1334 = vmul.f32 %v1234, 1.442695
        %v1335 = vpow.pop %v1334
        %v1336 = vmul.f32 %v1235, 1.442695
        %v1337 = vpow.pop %v1336
        %v1338 = vmul.f32 %v1236, 1.442695
        %v1339 = vpow.pop %v1338
        %v1340 = vmul.f32 %v1237, 1.442695
        %v1341 = vpow.pop %v1340
        %v1342 = vmul.f32 %v1238, 1.442695
        %v1343 = vpow.pop %v1342
        %v1344 = vmul.f32 %v1239, 1.442695
        %v1345 = vpow.pop %v1344
        %v1346 = vmul.f32 %v1240, 1.442695
        %v1347 = vpow.pop %v1346
        %v1348 = vmul.f32 %v1241, 1.442695
        %v1349 = vpow.pop %v1348
        %v1350 = vmul.f32 %v1242, 1.442695
        %v1351 = vpow.pop %v1350
        %v1352 = vmul.f32 %v1243, 1.442695
        %v1353 = vpow.pop %v1352
        %v1354 = vmul.f32 %v1244, 1.442695
        %v1355 = vpow.pop %v1354
        %v1356 = vmul.f32 %v1245, 1.442695
        %v1357 = vpow.pop %v1356
        %v1358 = vmul.f32 %v1246, 1.442695
        %v1359 = vpow.pop %v1358
        %v1360 = vmul.f32 %v1247, 1.442695
        %v1361 = vpow.pop %v1360
        %v1362 = vmul.f32 %v1248, 1.442695
        %v1363 = vpow.pop %v1362
        %v1364 = vmul.f32 %v1249, 1.442695
        %v1365 = vpow.pop %v1364
        %v1366 = vmul.f32 %v1250, 1.442695
        %v1367 = vpow.pop %v1366
        %v1368 = vmul.f32 %v1251, 1.442695
        %v1369 = vpow.pop %v1368
        %v1370 = vmul.f32 %v1252, 1.442695
        %v1371 = vpow.pop %v1370
        %v1372 = vmul.f32 %v1253, 1.442695
        %v1373 = vpow.pop %v1372
        %v1374 = vmul.f32 %v1254, 1.442695
        %v1375 = vpow.pop %v1374
        %v1376 = vmul.f32 %v1255, 1.442695
        %v1377 = vpow.pop %v1376
        %v1378 = vmul.f32 %v1256, 1.442695
        %v1379 = vpow.pop %v1378
        %v1380 = vmul.f32 %v1257, 1.442695
        %v1381 = vpow.pop %v1380
        %v1382 = vmul.f32 %v1258, 1.442695
        %v1383 = vpow.pop %v1382
        %v1384 = vmul.f32 %v1259, 1.442695
        %v1385 = vpow.pop %v1384
        %v1386 = vmul.f32 %v1260, 1.442695
        %v1387 = vpow.pop %v1386
        %v1388 = vmul.f32 %v1261, 1.442695
        %v1389 = vpow.pop %v1388
        %v1390 = vadd.f32 %v1263, %v1265
        %1391 = vadd.xlane.f32.xlu0 %v1390
        %v1392 = vpop.xlane.xlu0 %1391
        %v1393 = vadd.f32 %v1267, %v1269
        %1394 = vadd.xlane.f32.xlu0 %v1393
        %v1395 = vpop.xlane.xlu0 %1394
        %v1396 = vadd.f32 %v1271, %v1273
        %1397 = vadd.xlane.f32.xlu0 %v1396
        %v1398 = vpop.xlane.xlu0 %1397
        %v1399 = vadd.f32 %v1275, %v1277
        %1400 = vadd.xlane.f32.xlu0 %v1399
        %v1401 = vpop.xlane.xlu0 %1400
        %v1402 = vadd.f32 %v1279, %v1281
        %1403 = vadd.xlane.f32.xlu0 %v1402
        %v1404 = vpop.xlane.xlu0 %1403
        %v1405 = vadd.f32 %v1283, %v1285
        %1406 = vadd.xlane.f32.xlu0 %v1405
        %v1407 = vpop.xlane.xlu0 %1406
        %v1408 = vadd.f32 %v1287, %v1289
        %1409 = vadd.xlane.f32.xlu0 %v1408
        %v1410 = vpop.xlane.xlu0 %1409
        %v1411 = vadd.f32 %v1291, %v1293
        %1412 = vadd.xlane.f32.xlu0 %v1411
        %v1413 = vpop.xlane.xlu0 %1412
        %v1414 = vadd.f32 %v1295, %v1297
        %1415 = vadd.xlane.f32.xlu0 %v1414
        %v1416 = vpop.xlane.xlu0 %1415
        %v1417 = vadd.f32 %v1299, %v1301
        %1418 = vadd.xlane.f32.xlu0 %v1417
        %v1419 = vpop.xlane.xlu0 %1418
        %v1420 = vadd.f32 %v1303, %v1305
        %1421 = vadd.xlane.f32.xlu0 %v1420
        %v1422 = vpop.xlane.xlu0 %1421
        %v1423 = vadd.f32 %v1307, %v1309
        %1424 = vadd.xlane.f32.xlu0 %v1423
        %v1425 = vpop.xlane.xlu0 %1424
        %v1426 = vadd.f32 %v1311, %v1313
        %1427 = vadd.xlane.f32.xlu0 %v1426
        %v1428 = vpop.xlane.xlu0 %1427
        %v1429 = vadd.f32 %v1315, %v1317
        %1430 = vadd.xlane.f32.xlu0 %v1429
        %v1431 = vpop.xlane.xlu0 %1430
        %v1432 = vadd.f32 %v1319, %v1321
        %1433 = vadd.xlane.f32.xlu0 %v1432
        %v1434 = vpop.xlane.xlu0 %1433
        %v1435 = vadd.f32 %v1323, %v1325
        %1436 = vadd.xlane.f32.xlu0 %v1435
        %v1437 = vpop.xlane.xlu0 %1436
        %v1438 = vadd.f32 %v1327, %v1329
        %1439 = vadd.xlane.f32.xlu0 %v1438
        %v1440 = vpop.xlane.xlu0 %1439
        %v1441 = vadd.f32 %v1331, %v1333
        %1442 = vadd.xlane.f32.xlu0 %v1441
        %v1443 = vpop.xlane.xlu0 %1442
        %v1444 = vadd.f32 %v1335, %v1337
        %1445 = vadd.xlane.f32.xlu0 %v1444
        %v1446 = vpop.xlane.xlu0 %1445
        %v1447 = vadd.f32 %v1339, %v1341
        %1448 = vadd.xlane.f32.xlu0 %v1447
        %v1449 = vpop.xlane.xlu0 %1448
        %v1450 = vadd.f32 %v1343, %v1345
        %1451 = vadd.xlane.f32.xlu0 %v1450
        %v1452 = vpop.xlane.xlu0 %1451
        %v1453 = vadd.f32 %v1347, %v1349
        %1454 = vadd.xlane.f32.xlu0 %v1453
        %v1455 = vpop.xlane.xlu0 %1454
        %v1456 = vadd.f32 %v1351, %v1353
        %1457 = vadd.xlane.f32.xlu0 %v1456
        %v1458 = vpop.xlane.xlu0 %1457
        %v1459 = vadd.f32 %v1355, %v1357
        %1460 = vadd.xlane.f32.xlu0 %v1459
        %v1461 = vpop.xlane.xlu0 %1460
        %v1462 = vadd.f32 %v1359, %v1361
        %1463 = vadd.xlane.f32.xlu0 %v1462
        %v1464 = vpop.xlane.xlu0 %1463
        %v1465 = vadd.f32 %v1363, %v1365
        %1466 = vadd.xlane.f32.xlu0 %v1465
        %v1467 = vpop.xlane.xlu0 %1466
        %v1468 = vadd.f32 %v1367, %v1369
        %1469 = vadd.xlane.f32.xlu0 %v1468
        %v1470 = vpop.xlane.xlu0 %1469
        %v1471 = vadd.f32 %v1371, %v1373
        %1472 = vadd.xlane.f32.xlu0 %v1471
        %v1473 = vpop.xlane.xlu0 %1472
        %v1474 = vadd.f32 %v1375, %v1377
        %1475 = vadd.xlane.f32.xlu0 %v1474
        %v1476 = vpop.xlane.xlu0 %1475
        %v1477 = vadd.f32 %v1379, %v1381
        %1478 = vadd.xlane.f32.xlu0 %v1477
        %v1479 = vpop.xlane.xlu0 %1478
        %v1480 = vadd.f32 %v1383, %v1385
        %1481 = vadd.xlane.f32.xlu0 %v1480
        %v1482 = vpop.xlane.xlu0 %1481
        %v1483 = vadd.f32 %v1387, %v1389
        %1484 = vadd.xlane.f32.xlu0 %v1483
        %v1485 = vpop.xlane.xlu0 %1484
        %v1486 = vrcp.pop %v1392
        %v1487 = vrcp.pop %v1395
        %v1488 = vrcp.pop %v1398
        %v1489 = vrcp.pop %v1401
        %v1490 = vrcp.pop %v1404
        %v1491 = vrcp.pop %v1407
        %v1492 = vrcp.pop %v1410
        %v1493 = vrcp.pop %v1413
        %v1494 = vrcp.pop %v1416
        %v1495 = vrcp.pop %v1419
        %v1496 = vrcp.pop %v1422
        %v1497 = vrcp.pop %v1425
        %v1498 = vrcp.pop %v1428
        %v1499 = vrcp.pop %v1431
        %v1500 = vrcp.pop %v1434
        %v1501 = vrcp.pop %v1437
        %v1502 = vrcp.pop %v1440
        %v1503 = vrcp.pop %v1443
        %v1504 = vrcp.pop %v1446
        %v1505 = vrcp.pop %v1449
        %v1506 = vrcp.pop %v1452
        %v1507 = vrcp.pop %v1455
        %v1508 = vrcp.pop %v1458
        %v1509 = vrcp.pop %v1461
        %v1510 = vrcp.pop %v1464
        %v1511 = vrcp.pop %v1467
        %v1512 = vrcp.pop %v1470
        %v1513 = vrcp.pop %v1473
        %v1514 = vrcp.pop %v1476
        %v1515 = vrcp.pop %v1479
        %v1516 = vrcp.pop %v1482
        %v1517 = vrcp.pop %v1485
        %v1518 = vstv %s1101
        %v1519 = vmul.f32 %v1486, %v1518
        %v1520 = vmul.f32 %v1487, %v1518
        %v1521 = vmul.f32 %v1488, %v1518
        %v1522 = vmul.f32 %v1489, %v1518
        %v1523 = vmul.f32 %v1490, %v1518
        %v1524 = vmul.f32 %v1491, %v1518
        %v1525 = vmul.f32 %v1492, %v1518
        %v1526 = vmul.f32 %v1493, %v1518
        %v1527 = vmul.f32 %v1494, %v1518
        %v1528 = vmul.f32 %v1495, %v1518
        %v1529 = vmul.f32 %v1496, %v1518
        %v1530 = vmul.f32 %v1497, %v1518
        %v1531 = vmul.f32 %v1498, %v1518
        %v1532 = vmul.f32 %v1499, %v1518
        %v1533 = vmul.f32 %v1500, %v1518
        %v1534 = vmul.f32 %v1501, %v1518
        %v1535 = vmul.f32 %v1502, %v1518
        %v1536 = vmul.f32 %v1503, %v1518
        %v1537 = vmul.f32 %v1504, %v1518
        %v1538 = vmul.f32 %v1505, %v1518
        %v1539 = vmul.f32 %v1506, %v1518
        %v1540 = vmul.f32 %v1507, %v1518
        %v1541 = vmul.f32 %v1508, %v1518
        %v1542 = vmul.f32 %v1509, %v1518
        %v1543 = vmul.f32 %v1510, %v1518
        %v1544 = vmul.f32 %v1511, %v1518
        %v1545 = vmul.f32 %v1512, %v1518
        %v1546 = vmul.f32 %v1513, %v1518
        %v1547 = vmul.f32 %v1514, %v1518
        %v1548 = vmul.f32 %v1515, %v1518
        %v1549 = vmul.f32 %v1516, %v1518
        %v1550 = vmul.f32 %v1517, %v1518
        %s1551 = sld [smem:[#allocation5 + $0x1]]
        %v1552 = vmax.f32 %v933, %v1022
        %1553 = vmax.xlane.f32.xlu0 %v1552
        %v1554 = vpop.xlane.xlu0 %1553
        %v1555 = vmax.f32 %v935, %v1024
        %1556 = vmax.xlane.f32.xlu0 %v1555
        %v1557 = vpop.xlane.xlu0 %1556
        %v1558 = vmax.f32 %v938, %v1027
        %1559 = vmax.xlane.f32.xlu0 %v1558
        %v1560 = vpop.xlane.xlu0 %1559
        %v1561 = vmax.f32 %v940, %v1029
        %1562 = vmax.xlane.f32.xlu0 %v1561
        %v1563 = vpop.xlane.xlu0 %1562
        %v1564 = vmax.f32 %v943, %v1032
        %1565 = vmax.xlane.f32.xlu0 %v1564
        %v1566 = vpop.xlane.xlu0 %1565
        %v1567 = vmax.f32 %v945, %v1034
        %1568 = vmax.xlane.f32.xlu0 %v1567
        %v1569 = vpop.xlane.xlu0 %1568
        %v1570 = vmax.f32 %v948, %v1037
        %1571 = vmax.xlane.f32.xlu0 %v1570
        %v1572 = vpop.xlane.xlu0 %1571
        %v1573 = vmax.f32 %v950, %v1039
        %1574 = vmax.xlane.f32.xlu0 %v1573
        %v1575 = vpop.xlane.xlu0 %1574
        %v1576 = vmax.f32 %v953, %v1042
        %1577 = vmax.xlane.f32.xlu0 %v1576
        %v1578 = vpop.xlane.xlu0 %1577
        %v1579 = vmax.f32 %v955, %v1044
        %1580 = vmax.xlane.f32.xlu0 %v1579
        %v1581 = vpop.xlane.xlu0 %1580
        %v1582 = vmax.f32 %v958, %v1047
        %1583 = vmax.xlane.f32.xlu0 %v1582
        %v1584 = vpop.xlane.xlu0 %1583
        %v1585 = vmax.f32 %v960, %v1049
        %1586 = vmax.xlane.f32.xlu0 %v1585
        %v1587 = vpop.xlane.xlu0 %1586
        %v1588 = vmax.f32 %v963, %v1052
        %1589 = vmax.xlane.f32.xlu0 %v1588
        %v1590 = vpop.xlane.xlu0 %1589
        %v1591 = vmax.f32 %v965, %v1054
        %1592 = vmax.xlane.f32.xlu0 %v1591
        %v1593 = vpop.xlane.xlu0 %1592
        %v1594 = vmax.f32 %v968, %v1057
        %1595 = vmax.xlane.f32.xlu0 %v1594
        %v1596 = vpop.xlane.xlu0 %1595
        %v1597 = vmax.f32 %v970, %v1059
        %1598 = vmax.xlane.f32.xlu0 %v1597
        %v1599 = vpop.xlane.xlu0 %1598
        %v1600 = vmax.f32 %v973, %v1062
        %1601 = vmax.xlane.f32.xlu0 %v1600
        %v1602 = vpop.xlane.xlu0 %1601
        %v1603 = vmax.f32 %v975, %v1064
        %1604 = vmax.xlane.f32.xlu0 %v1603
        %v1605 = vpop.xlane.xlu0 %1604
        %v1606 = vmax.f32 %v978, %v1067
        %1607 = vmax.xlane.f32.xlu0 %v1606
        %v1608 = vpop.xlane.xlu0 %1607
        %v1609 = vmax.f32 %v980, %v1069
        %1610 = vmax.xlane.f32.xlu0 %v1609
        %v1611 = vpop.xlane.xlu0 %1610
        %v1612 = vmax.f32 %v983, %v1072
        %1613 = vmax.xlane.f32.xlu0 %v1612
        %v1614 = vpop.xlane.xlu0 %1613
        %v1615 = vmax.f32 %v985, %v1074
        %1616 = vmax.xlane.f32.xlu0 %v1615
        %v1617 = vpop.xlane.xlu0 %1616
        %v1618 = vmax.f32 %v988, %v1077
        %1619 = vmax.xlane.f32.xlu0 %v1618
        %v1620 = vpop.xlane.xlu0 %1619
        %v1621 = vmax.f32 %v990, %v1079
        %1622 = vmax.xlane.f32.xlu0 %v1621
        %v1623 = vpop.xlane.xlu0 %1622
        %v1624 = vmax.f32 %v993, %v1082
        %1625 = vmax.xlane.f32.xlu0 %v1624
        %v1626 = vpop.xlane.xlu0 %1625
        %v1627 = vmax.f32 %v995, %v1084
        %1628 = vmax.xlane.f32.xlu0 %v1627
        %v1629 = vpop.xlane.xlu0 %1628
        %v1630 = vmax.f32 %v998, %v1087
        %1631 = vmax.xlane.f32.xlu0 %v1630
        %v1632 = vpop.xlane.xlu0 %1631
        %v1633 = vmax.f32 %v1000, %v1089
        %1634 = vmax.xlane.f32.xlu0 %v1633
        %v1635 = vpop.xlane.xlu0 %1634
        %v1636 = vmax.f32 %v1003, %v1092
        %1637 = vmax.xlane.f32.xlu0 %v1636
        %v1638 = vpop.xlane.xlu0 %1637
        %v1639 = vmax.f32 %v1005, %v1094
        %1640 = vmax.xlane.f32.xlu0 %v1639
        %v1641 = vpop.xlane.xlu0 %1640
        %v1642 = vmax.f32 %v1008, %v1097
        %1643 = vmax.xlane.f32.xlu0 %v1642
        %v1644 = vpop.xlane.xlu0 %1643
        %v1645 = vmax.f32 %v1010, %v1099
        %1646 = vmax.xlane.f32.xlu0 %v1645
        %v1647 = vpop.xlane.xlu0 %1646
        %v1648 = vsub.f32 %v933, %v1554
        %v1649 = vsub.f32 %v1022, %v1554
        %v1650 = vsub.f32 %v935, %v1557
        %v1651 = vsub.f32 %v1024, %v1557
        %v1652 = vsub.f32 %v938, %v1560
        %v1653 = vsub.f32 %v1027, %v1560
        %v1654 = vsub.f32 %v940, %v1563
        %v1655 = vsub.f32 %v1029, %v1563
        %v1656 = vsub.f32 %v943, %v1566
        %v1657 = vsub.f32 %v1032, %v1566
        %v1658 = vsub.f32 %v945, %v1569
        %v1659 = vsub.f32 %v1034, %v1569
        %v1660 = vsub.f32 %v948, %v1572
        %v1661 = vsub.f32 %v1037, %v1572
        %v1662 = vsub.f32 %v950, %v1575
        %v1663 = vsub.f32 %v1039, %v1575
        %v1664 = vsub.f32 %v953, %v1578
        %v1665 = vsub.f32 %v1042, %v1578
        %v1666 = vsub.f32 %v955, %v1581
        %v1667 = vsub.f32 %v1044, %v1581
        %v1668 = vsub.f32 %v958, %v1584
        %v1669 = vsub.f32 %v1047, %v1584
        %v1670 = vsub.f32 %v960, %v1587
        %v1671 = vsub.f32 %v1049, %v1587
        %v1672 = vsub.f32 %v963, %v1590
        %v1673 = vsub.f32 %v1052, %v1590
        %v1674 = vsub.f32 %v965, %v1593
        %v1675 = vsub.f32 %v1054, %v1593
        %v1676 = vsub.f32 %v968, %v1596
        %v1677 = vsub.f32 %v1057, %v1596
        %v1678 = vsub.f32 %v970, %v1599
        %v1679 = vsub.f32 %v1059, %v1599
        %v1680 = vsub.f32 %v973, %v1602
        %v1681 = vsub.f32 %v1062, %v1602
        %v1682 = vsub.f32 %v975, %v1605
        %v1683 = vsub.f32 %v1064, %v1605
        %v1684 = vsub.f32 %v978, %v1608
        %v1685 = vsub.f32 %v1067, %v1608
        %v1686 = vsub.f32 %v980, %v1611
        %v1687 = vsub.f32 %v1069, %v1611
        %v1688 = vsub.f32 %v983, %v1614
        %v1689 = vsub.f32 %v1072, %v1614
        %v1690 = vsub.f32 %v985, %v1617
        %v1691 = vsub.f32 %v1074, %v1617
        %v1692 = vsub.f32 %v988, %v1620
        %v1693 = vsub.f32 %v1077, %v1620
        %v1694 = vsub.f32 %v990, %v1623
        %v1695 = vsub.f32 %v1079, %v1623
        %v1696 = vsub.f32 %v993, %v1626
        %v1697 = vsub.f32 %v1082, %v1626
        %v1698 = vsub.f32 %v995, %v1629
        %v1699 = vsub.f32 %v1084, %v1629
        %v1700 = vsub.f32 %v998, %v1632
        %v1701 = vsub.f32 %v1087, %v1632
        %v1702 = vsub.f32 %v1000, %v1635
        %v1703 = vsub.f32 %v1089, %v1635
        %v1704 = vsub.f32 %v1003, %v1638
        %v1705 = vsub.f32 %v1092, %v1638
        %v1706 = vsub.f32 %v1005, %v1641
        %v1707 = vsub.f32 %v1094, %v1641
        %v1708 = vsub.f32 %v1008, %v1644
        %v1709 = vsub.f32 %v1097, %v1644
        %v1710 = vsub.f32 %v1010, %v1647
        %v1711 = vsub.f32 %v1099, %v1647
        %v1712 = vmul.f32 %v1648, 1.442695
        %v1713 = vpow.pop %v1712
        %v1714 = vmul.f32 %v1649, 1.442695
        %v1715 = vpow.pop %v1714
        %v1716 = vmul.f32 %v1650, 1.442695
        %v1717 = vpow.pop %v1716
        %v1718 = vmul.f32 %v1651, 1.442695
        %v1719 = vpow.pop %v1718
        %v1720 = vmul.f32 %v1652, 1.442695
        %v1721 = vpow.pop %v1720
        %v1722 = vmul.f32 %v1653, 1.442695
        %v1723 = vpow.pop %v1722
        %v1724 = vmul.f32 %v1654, 1.442695
        %v1725 = vpow.pop %v1724
        %v1726 = vmul.f32 %v1655, 1.442695
        %v1727 = vpow.pop %v1726
        %v1728 = vmul.f32 %v1656, 1.442695
        %v1729 = vpow.pop %v1728
        %v1730 = vmul.f32 %v1657, 1.442695
        %v1731 = vpow.pop %v1730
        %v1732 = vmul.f32 %v1658, 1.442695
        %v1733 = vpow.pop %v1732
        %v1734 = vmul.f32 %v1659, 1.442695
        %v1735 = vpow.pop %v1734
        %v1736 = vmul.f32 %v1660, 1.442695
        %v1737 = vpow.pop %v1736
        %v1738 = vmul.f32 %v1661, 1.442695
        %v1739 = vpow.pop %v1738
        %v1740 = vmul.f32 %v1662, 1.442695
        %v1741 = vpow.pop %v1740
        %v1742 = vmul.f32 %v1663, 1.442695
        %v1743 = vpow.pop %v1742
        %v1744 = vmul.f32 %v1664, 1.442695
        %v1745 = vpow.pop %v1744
        %v1746 = vmul.f32 %v1665, 1.442695
        %v1747 = vpow.pop %v1746
        %v1748 = vmul.f32 %v1666, 1.442695
        %v1749 = vpow.pop %v1748
        %v1750 = vmul.f32 %v1667, 1.442695
        %v1751 = vpow.pop %v1750
        %v1752 = vmul.f32 %v1668, 1.442695
        %v1753 = vpow.pop %v1752
        %v1754 = vmul.f32 %v1669, 1.442695
        %v1755 = vpow.pop %v1754
        %v1756 = vmul.f32 %v1670, 1.442695
        %v1757 = vpow.pop %v1756
        %v1758 = vmul.f32 %v1671, 1.442695
        %v1759 = vpow.pop %v1758
        %v1760 = vmul.f32 %v1672, 1.442695
        %v1761 = vpow.pop %v1760
        %v1762 = vmul.f32 %v1673, 1.442695
        %v1763 = vpow.pop %v1762
        %v1764 = vmul.f32 %v1674, 1.442695
        %v1765 = vpow.pop %v1764
        %v1766 = vmul.f32 %v1675, 1.442695
        %v1767 = vpow.pop %v1766
        %v1768 = vmul.f32 %v1676, 1.442695
        %v1769 = vpow.pop %v1768
        %v1770 = vmul.f32 %v1677, 1.442695
        %v1771 = vpow.pop %v1770
        %v1772 = vmul.f32 %v1678, 1.442695
        %v1773 = vpow.pop %v1772
        %v1774 = vmul.f32 %v1679, 1.442695
        %v1775 = vpow.pop %v1774
        %v1776 = vmul.f32 %v1680, 1.442695
        %v1777 = vpow.pop %v1776
        %v1778 = vmul.f32 %v1681, 1.442695
        %v1779 = vpow.pop %v1778
        %v1780 = vmul.f32 %v1682, 1.442695
        %v1781 = vpow.pop %v1780
        %v1782 = vmul.f32 %v1683, 1.442695
        %v1783 = vpow.pop %v1782
        %v1784 = vmul.f32 %v1684, 1.442695
        %v1785 = vpow.pop %v1784
        %v1786 = vmul.f32 %v1685, 1.442695
        %v1787 = vpow.pop %v1786
        %v1788 = vmul.f32 %v1686, 1.442695
        %v1789 = vpow.pop %v1788
        %v1790 = vmul.f32 %v1687, 1.442695
        %v1791 = vpow.pop %v1790
        %v1792 = vmul.f32 %v1688, 1.442695
        %v1793 = vpow.pop %v1792
        %v1794 = vmul.f32 %v1689, 1.442695
        %v1795 = vpow.pop %v1794
        %v1796 = vmul.f32 %v1690, 1.442695
        %v1797 = vpow.pop %v1796
        %v1798 = vmul.f32 %v1691, 1.442695
        %v1799 = vpow.pop %v1798
        %v1800 = vmul.f32 %v1692, 1.442695
        %v1801 = vpow.pop %v1800
        %v1802 = vmul.f32 %v1693, 1.442695
        %v1803 = vpow.pop %v1802
        %v1804 = vmul.f32 %v1694, 1.442695
        %v1805 = vpow.pop %v1804
        %v1806 = vmul.f32 %v1695, 1.442695
        %v1807 = vpow.pop %v1806
        %v1808 = vmul.f32 %v1696, 1.442695
        %v1809 = vpow.pop %v1808
        %v1810 = vmul.f32 %v1697, 1.442695
        %v1811 = vpow.pop %v1810
        %v1812 = vmul.f32 %v1698, 1.442695
        %v1813 = vpow.pop %v1812
        %v1814 = vmul.f32 %v1699, 1.442695
        %v1815 = vpow.pop %v1814
        %v1816 = vmul.f32 %v1700, 1.442695
        %v1817 = vpow.pop %v1816
        %v1818 = vmul.f32 %v1701, 1.442695
        %v1819 = vpow.pop %v1818
        %v1820 = vmul.f32 %v1702, 1.442695
        %v1821 = vpow.pop %v1820
        %v1822 = vmul.f32 %v1703, 1.442695
        %v1823 = vpow.pop %v1822
        %v1824 = vmul.f32 %v1704, 1.442695
        %v1825 = vpow.pop %v1824
        %v1826 = vmul.f32 %v1705, 1.442695
        %v1827 = vpow.pop %v1826
        %v1828 = vmul.f32 %v1706, 1.442695
        %v1829 = vpow.pop %v1828
        %v1830 = vmul.f32 %v1707, 1.442695
        %v1831 = vpow.pop %v1830
        %v1832 = vmul.f32 %v1708, 1.442695
        %v1833 = vpow.pop %v1832
        %v1834 = vmul.f32 %v1709, 1.442695
        %v1835 = vpow.pop %v1834
        %v1836 = vmul.f32 %v1710, 1.442695
        %v1837 = vpow.pop %v1836
        %v1838 = vmul.f32 %v1711, 1.442695
        %v1839 = vpow.pop %v1838
        %v1840 = vadd.f32 %v1713, %v1715
        %1841 = vadd.xlane.f32.xlu0 %v1840
        %v1842 = vpop.xlane.xlu0 %1841
        %v1843 = vadd.f32 %v1717, %v1719
        %1844 = vadd.xlane.f32.xlu0 %v1843
        %v1845 = vpop.xlane.xlu0 %1844
        %v1846 = vadd.f32 %v1721, %v1723
        %1847 = vadd.xlane.f32.xlu0 %v1846
        %v1848 = vpop.xlane.xlu0 %1847
        %v1849 = vadd.f32 %v1725, %v1727
        %1850 = vadd.xlane.f32.xlu0 %v1849
        %v1851 = vpop.xlane.xlu0 %1850
        %v1852 = vadd.f32 %v1729, %v1731
        %1853 = vadd.xlane.f32.xlu0 %v1852
        %v1854 = vpop.xlane.xlu0 %1853
        %v1855 = vadd.f32 %v1733, %v1735
        %1856 = vadd.xlane.f32.xlu0 %v1855
        %v1857 = vpop.xlane.xlu0 %1856
        %v1858 = vadd.f32 %v1737, %v1739
        %1859 = vadd.xlane.f32.xlu0 %v1858
        %v1860 = vpop.xlane.xlu0 %1859
        %v1861 = vadd.f32 %v1741, %v1743
        %1862 = vadd.xlane.f32.xlu0 %v1861
        %v1863 = vpop.xlane.xlu0 %1862
        %v1864 = vadd.f32 %v1745, %v1747
        %1865 = vadd.xlane.f32.xlu0 %v1864
        %v1866 = vpop.xlane.xlu0 %1865
        %v1867 = vadd.f32 %v1749, %v1751
        %1868 = vadd.xlane.f32.xlu0 %v1867
        %v1869 = vpop.xlane.xlu0 %1868
        %v1870 = vadd.f32 %v1753, %v1755
        %1871 = vadd.xlane.f32.xlu0 %v1870
        %v1872 = vpop.xlane.xlu0 %1871
        %v1873 = vadd.f32 %v1757, %v1759
        %1874 = vadd.xlane.f32.xlu0 %v1873
        %v1875 = vpop.xlane.xlu0 %1874
        %v1876 = vadd.f32 %v1761, %v1763
        %1877 = vadd.xlane.f32.xlu0 %v1876
        %v1878 = vpop.xlane.xlu0 %1877
        %v1879 = vadd.f32 %v1765, %v1767
        %1880 = vadd.xlane.f32.xlu0 %v1879
        %v1881 = vpop.xlane.xlu0 %1880
        %v1882 = vadd.f32 %v1769, %v1771
        %1883 = vadd.xlane.f32.xlu0 %v1882
        %v1884 = vpop.xlane.xlu0 %1883
        %v1885 = vadd.f32 %v1773, %v1775
        %1886 = vadd.xlane.f32.xlu0 %v1885
        %v1887 = vpop.xlane.xlu0 %1886
        %v1888 = vadd.f32 %v1777, %v1779
        %1889 = vadd.xlane.f32.xlu0 %v1888
        %v1890 = vpop.xlane.xlu0 %1889
        %v1891 = vadd.f32 %v1781, %v1783
        %1892 = vadd.xlane.f32.xlu0 %v1891
        %v1893 = vpop.xlane.xlu0 %1892
        %v1894 = vadd.f32 %v1785, %v1787
        %1895 = vadd.xlane.f32.xlu0 %v1894
        %v1896 = vpop.xlane.xlu0 %1895
        %v1897 = vadd.f32 %v1789, %v1791
        %1898 = vadd.xlane.f32.xlu0 %v1897
        %v1899 = vpop.xlane.xlu0 %1898
        %v1900 = vadd.f32 %v1793, %v1795
        %1901 = vadd.xlane.f32.xlu0 %v1900
        %v1902 = vpop.xlane.xlu0 %1901
        %v1903 = vadd.f32 %v1797, %v1799
        %1904 = vadd.xlane.f32.xlu0 %v1903
        %v1905 = vpop.xlane.xlu0 %1904
        %v1906 = vadd.f32 %v1801, %v1803
        %1907 = vadd.xlane.f32.xlu0 %v1906
        %v1908 = vpop.xlane.xlu0 %1907
        %v1909 = vadd.f32 %v1805, %v1807
        %1910 = vadd.xlane.f32.xlu0 %v1909
        %v1911 = vpop.xlane.xlu0 %1910
        %v1912 = vadd.f32 %v1809, %v1811
        %1913 = vadd.xlane.f32.xlu0 %v1912
        %v1914 = vpop.xlane.xlu0 %1913
        %v1915 = vadd.f32 %v1813, %v1815
        %1916 = vadd.xlane.f32.xlu0 %v1915
        %v1917 = vpop.xlane.xlu0 %1916
        %v1918 = vadd.f32 %v1817, %v1819
        %1919 = vadd.xlane.f32.xlu0 %v1918
        %v1920 = vpop.xlane.xlu0 %1919
        %v1921 = vadd.f32 %v1821, %v1823
        %1922 = vadd.xlane.f32.xlu0 %v1921
        %v1923 = vpop.xlane.xlu0 %1922
        %v1924 = vadd.f32 %v1825, %v1827
        %1925 = vadd.xlane.f32.xlu0 %v1924
        %v1926 = vpop.xlane.xlu0 %1925
        %v1927 = vadd.f32 %v1829, %v1831
        %1928 = vadd.xlane.f32.xlu0 %v1927
        %v1929 = vpop.xlane.xlu0 %1928
        %v1930 = vadd.f32 %v1833, %v1835
        %1931 = vadd.xlane.f32.xlu0 %v1930
        %v1932 = vpop.xlane.xlu0 %1931
        %v1933 = vadd.f32 %v1837, %v1839
        %1934 = vadd.xlane.f32.xlu0 %v1933
        %v1935 = vpop.xlane.xlu0 %1934
        %v1936 = vrcp.pop %v1842
        %v1937 = vrcp.pop %v1845
        %v1938 = vrcp.pop %v1848
        %v1939 = vrcp.pop %v1851
        %v1940 = vrcp.pop %v1854
        %v1941 = vrcp.pop %v1857
        %v1942 = vrcp.pop %v1860
        %v1943 = vrcp.pop %v1863
        %v1944 = vrcp.pop %v1866
        %v1945 = vrcp.pop %v1869
        %v1946 = vrcp.pop %v1872
        %v1947 = vrcp.pop %v1875
        %v1948 = vrcp.pop %v1878
        %v1949 = vrcp.pop %v1881
        %v1950 = vrcp.pop %v1884
        %v1951 = vrcp.pop %v1887
        %v1952 = vrcp.pop %v1890
        %v1953 = vrcp.pop %v1893
        %v1954 = vrcp.pop %v1896
        %v1955 = vrcp.pop %v1899
        %v1956 = vrcp.pop %v1902
        %v1957 = vrcp.pop %v1905
        %v1958 = vrcp.pop %v1908
        %v1959 = vrcp.pop %v1911
        %v1960 = vrcp.pop %v1914
        %v1961 = vrcp.pop %v1917
        %v1962 = vrcp.pop %v1920
        %v1963 = vrcp.pop %v1923
        %v1964 = vrcp.pop %v1926
        %v1965 = vrcp.pop %v1929
        %v1966 = vrcp.pop %v1932
        %v1967 = vrcp.pop %v1935
        %v1968 = vstv %s1551
        %v1969 = vmul.f32 %v1936, %v1968
        %v1970 = vmul.f32 %v1937, %v1968
        %v1971 = vmul.f32 %v1938, %v1968
        %v1972 = vmul.f32 %v1939, %v1968
        %v1973 = vmul.f32 %v1940, %v1968
        %v1974 = vmul.f32 %v1941, %v1968
        %v1975 = vmul.f32 %v1942, %v1968
        %v1976 = vmul.f32 %v1943, %v1968
        %v1977 = vmul.f32 %v1944, %v1968
        %v1978 = vmul.f32 %v1945, %v1968
        %v1979 = vmul.f32 %v1946, %v1968
        %v1980 = vmul.f32 %v1947, %v1968
        %v1981 = vmul.f32 %v1948, %v1968
        %v1982 = vmul.f32 %v1949, %v1968
        %v1983 = vmul.f32 %v1950, %v1968
        %v1984 = vmul.f32 %v1951, %v1968
        %v1985 = vmul.f32 %v1952, %v1968
        %v1986 = vmul.f32 %v1953, %v1968
        %v1987 = vmul.f32 %v1954, %v1968
        %v1988 = vmul.f32 %v1955, %v1968
        %v1989 = vmul.f32 %v1956, %v1968
        %v1990 = vmul.f32 %v1957, %v1968
        %v1991 = vmul.f32 %v1958, %v1968
        %v1992 = vmul.f32 %v1959, %v1968
        %v1993 = vmul.f32 %v1960, %v1968
        %v1994 = vmul.f32 %v1961, %v1968
        %v1995 = vmul.f32 %v1962, %v1968
        %v1996 = vmul.f32 %v1963, %v1968
        %v1997 = vmul.f32 %v1964, %v1968
        %v1998 = vmul.f32 %v1965, %v1968
        %v1999 = vmul.f32 %v1966, %v1968
        %v2000 = vmul.f32 %v1967, %v1968
        %v2001 = vmul.f32 %v1263, %v1519
        %v2002 = vmul.f32 %v1265, %v1519
        %v2003 = vmul.f32 %v1267, %v1520
        %v2004 = vmul.f32 %v1269, %v1520
        %v2005 = vmul.f32 %v1271, %v1521
        %v2006 = vmul.f32 %v1273, %v1521
        %v2007 = vmul.f32 %v1275, %v1522
        %v2008 = vmul.f32 %v1277, %v1522
        %v2009 = vmul.f32 %v1279, %v1523
        %v2010 = vmul.f32 %v1281, %v1523
        %v2011 = vmul.f32 %v1283, %v1524
        %v2012 = vmul.f32 %v1285, %v1524
        %v2013 = vmul.f32 %v1287, %v1525
        %v2014 = vmul.f32 %v1289, %v1525
        %v2015 = vmul.f32 %v1291, %v1526
        %v2016 = vmul.f32 %v1293, %v1526
        %v2017 = vmul.f32 %v1295, %v1527
        %v2018 = vmul.f32 %v1297, %v1527
        %v2019 = vmul.f32 %v1299, %v1528
        %v2020 = vmul.f32 %v1301, %v1528
        %v2021 = vmul.f32 %v1303, %v1529
        %v2022 = vmul.f32 %v1305, %v1529
        %v2023 = vmul.f32 %v1307, %v1530
        %v2024 = vmul.f32 %v1309, %v1530
        %v2025 = vmul.f32 %v1311, %v1531
        %v2026 = vmul.f32 %v1313, %v1531
        %v2027 = vmul.f32 %v1315, %v1532
        %v2028 = vmul.f32 %v1317, %v1532
        %v2029 = vmul.f32 %v1319, %v1533
        %v2030 = vmul.f32 %v1321, %v1533
        %v2031 = vmul.f32 %v1323, %v1534
        %v2032 = vmul.f32 %v1325, %v1534
        %v2033 = vmul.f32 %v1327, %v1535
        %v2034 = vmul.f32 %v1329, %v1535
        %v2035 = vmul.f32 %v1331, %v1536
        %v2036 = vmul.f32 %v1333, %v1536
        %v2037 = vmul.f32 %v1335, %v1537
        %v2038 = vmul.f32 %v1337, %v1537
        %v2039 = vmul.f32 %v1339, %v1538
        %v2040 = vmul.f32 %v1341, %v1538
        %v2041 = vmul.f32 %v1343, %v1539
        %v2042 = vmul.f32 %v1345, %v1539
        %v2043 = vmul.f32 %v1347, %v1540
        %v2044 = vmul.f32 %v1349, %v1540
        %v2045 = vmul.f32 %v1351, %v1541
        %v2046 = vmul.f32 %v1353, %v1541
        %v2047 = vmul.f32 %v1355, %v1542
        %v2048 = vmul.f32 %v1357, %v1542
        %v2049 = vmul.f32 %v1359, %v1543
        %v2050 = vmul.f32 %v1361, %v1543
        %v2051 = vmul.f32 %v1363, %v1544
        %v2052 = vmul.f32 %v1365, %v1544
        %v2053 = vmul.f32 %v1367, %v1545
        %v2054 = vmul.f32 %v1369, %v1545
        %v2055 = vmul.f32 %v1371, %v1546
        %v2056 = vmul.f32 %v1373, %v1546
        %v2057 = vmul.f32 %v1375, %v1547
        %v2058 = vmul.f32 %v1377, %v1547
        %v2059 = vmul.f32 %v1379, %v1548
        %v2060 = vmul.f32 %v1381, %v1548
        %v2061 = vmul.f32 %v1383, %v1549
        %v2062 = vmul.f32 %v1385, %v1549
        %v2063 = vmul.f32 %v1387, %v1550
        %v2064 = vmul.f32 %v1389, %v1550
        %v2065 = vmul.f32 %v1713, %v1969
        %v2066 = vmul.f32 %v1715, %v1969
        %v2067 = vmul.f32 %v1717, %v1970
        %v2068 = vmul.f32 %v1719, %v1970
        %v2069 = vmul.f32 %v1721, %v1971
        %v2070 = vmul.f32 %v1723, %v1971
        %v2071 = vmul.f32 %v1725, %v1972
        %v2072 = vmul.f32 %v1727, %v1972
        %v2073 = vmul.f32 %v1729, %v1973
        %v2074 = vmul.f32 %v1731, %v1973
        %v2075 = vmul.f32 %v1733, %v1974
        %v2076 = vmul.f32 %v1735, %v1974
        %v2077 = vmul.f32 %v1737, %v1975
        %v2078 = vmul.f32 %v1739, %v1975
        %v2079 = vmul.f32 %v1741, %v1976
        %v2080 = vmul.f32 %v1743, %v1976
        %v2081 = vmul.f32 %v1745, %v1977
        %v2082 = vmul.f32 %v1747, %v1977
        %v2083 = vmul.f32 %v1749, %v1978
        %v2084 = vmul.f32 %v1751, %v1978
        %v2085 = vmul.f32 %v1753, %v1979
        %v2086 = vmul.f32 %v1755, %v1979
        %v2087 = vmul.f32 %v1757, %v1980
        %v2088 = vmul.f32 %v1759, %v1980
        %v2089 = vmul.f32 %v1761, %v1981
        %v2090 = vmul.f32 %v1763, %v1981
        %v2091 = vmul.f32 %v1765, %v1982
        %v2092 = vmul.f32 %v1767, %v1982
        %v2093 = vmul.f32 %v1769, %v1983
        %v2094 = vmul.f32 %v1771, %v1983
        %v2095 = vmul.f32 %v1773, %v1984
        %v2096 = vmul.f32 %v1775, %v1984
        %v2097 = vmul.f32 %v1777, %v1985
        %v2098 = vmul.f32 %v1779, %v1985
        %v2099 = vmul.f32 %v1781, %v1986
        %v2100 = vmul.f32 %v1783, %v1986
        %v2101 = vmul.f32 %v1785, %v1987
        %v2102 = vmul.f32 %v1787, %v1987
        %v2103 = vmul.f32 %v1789, %v1988
        %v2104 = vmul.f32 %v1791, %v1988
        %v2105 = vmul.f32 %v1793, %v1989
        %v2106 = vmul.f32 %v1795, %v1989
        %v2107 = vmul.f32 %v1797, %v1990
        %v2108 = vmul.f32 %v1799, %v1990
        %v2109 = vmul.f32 %v1801, %v1991
        %v2110 = vmul.f32 %v1803, %v1991
        %v2111 = vmul.f32 %v1805, %v1992
        %v2112 = vmul.f32 %v1807, %v1992
        %v2113 = vmul.f32 %v1809, %v1993
        %v2114 = vmul.f32 %v1811, %v1993
        %v2115 = vmul.f32 %v1813, %v1994
        %v2116 = vmul.f32 %v1815, %v1994
        %v2117 = vmul.f32 %v1817, %v1995
        %v2118 = vmul.f32 %v1819, %v1995
        %v2119 = vmul.f32 %v1821, %v1996
        %v2120 = vmul.f32 %v1823, %v1996
        %v2121 = vmul.f32 %v1825, %v1997
        %v2122 = vmul.f32 %v1827, %v1997
        %v2123 = vmul.f32 %v1829, %v1998
        %v2124 = vmul.f32 %v1831, %v1998
        %v2125 = vmul.f32 %v1833, %v1999
        %v2126 = vmul.f32 %v1835, %v1999
        %v2127 = vmul.f32 %v1837, %v2000
        %v2128 = vmul.f32 %v1839, %v2000
        %v2129 = vadd.f32 %v2001, %v2065
        %v2130 = vadd.f32 %v2002, %v2066
        %v2131 = vadd.f32 %v2003, %v2067
        %v2132 = vadd.f32 %v2004, %v2068
        %v2133 = vadd.f32 %v2005, %v2069
        %v2134 = vadd.f32 %v2006, %v2070
        %v2135 = vadd.f32 %v2007, %v2071
        %v2136 = vadd.f32 %v2008, %v2072
        %v2137 = vadd.f32 %v2009, %v2073
        %v2138 = vadd.f32 %v2010, %v2074
        %v2139 = vadd.f32 %v2011, %v2075
        %v2140 = vadd.f32 %v2012, %v2076
        %v2141 = vadd.f32 %v2013, %v2077
        %v2142 = vadd.f32 %v2014, %v2078
        %v2143 = vadd.f32 %v2015, %v2079
        %v2144 = vadd.f32 %v2016, %v2080
        %v2145 = vadd.f32 %v2017, %v2081
        %v2146 = vadd.f32 %v2018, %v2082
        %v2147 = vadd.f32 %v2019, %v2083
        %v2148 = vadd.f32 %v2020, %v2084
        %v2149 = vadd.f32 %v2021, %v2085
        %v2150 = vadd.f32 %v2022, %v2086
        %v2151 = vadd.f32 %v2023, %v2087
        %v2152 = vadd.f32 %v2024, %v2088
        %v2153 = vadd.f32 %v2025, %v2089
        %v2154 = vadd.f32 %v2026, %v2090
        %v2155 = vadd.f32 %v2027, %v2091
        %v2156 = vadd.f32 %v2028, %v2092
        %v2157 = vadd.f32 %v2029, %v2093
        %v2158 = vadd.f32 %v2030, %v2094
        %v2159 = vadd.f32 %v2031, %v2095
        %v2160 = vadd.f32 %v2032, %v2096
        %v2161 = vadd.f32 %v2033, %v2097
        %v2162 = vadd.f32 %v2034, %v2098
        %v2163 = vadd.f32 %v2035, %v2099
        %v2164 = vadd.f32 %v2036, %v2100
        %v2165 = vadd.f32 %v2037, %v2101
        %v2166 = vadd.f32 %v2038, %v2102
        %v2167 = vadd.f32 %v2039, %v2103
        %v2168 = vadd.f32 %v2040, %v2104
        %v2169 = vadd.f32 %v2041, %v2105
        %v2170 = vadd.f32 %v2042, %v2106
        %v2171 = vadd.f32 %v2043, %v2107
        %v2172 = vadd.f32 %v2044, %v2108
        %v2173 = vadd.f32 %v2045, %v2109
        %v2174 = vadd.f32 %v2046, %v2110
        %v2175 = vadd.f32 %v2047, %v2111
        %v2176 = vadd.f32 %v2048, %v2112
        %v2177 = vadd.f32 %v2049, %v2113
        %v2178 = vadd.f32 %v2050, %v2114
        %v2179 = vadd.f32 %v2051, %v2115
        %v2180 = vadd.f32 %v2052, %v2116
        %v2181 = vadd.f32 %v2053, %v2117
        %v2182 = vadd.f32 %v2054, %v2118
        %v2183 = vadd.f32 %v2055, %v2119
        %v2184 = vadd.f32 %v2056, %v2120
        %v2185 = vadd.f32 %v2057, %v2121
        %v2186 = vadd.f32 %v2058, %v2122
        %v2187 = vadd.f32 %v2059, %v2123
        %v2188 = vadd.f32 %v2060, %v2124
        %v2189 = vadd.f32 %v2061, %v2125
        %v2190 = vadd.f32 %v2062, %v2126
        %v2191 = vadd.f32 %v2063, %v2127
        %v2192 = vadd.f32 %v2064, %v2128
        %v2193 = vld [vmem:[#allocation4] sm:$0xf]
        %v2194 = vpack.c.bf16 %v2131, %v2129
        %v2195 = vpack.c.bf16 %v2132, %v2130
        %v2196 = vpack.c.bf16 %v2135, %v2133
        %v2197 = vpack.c.bf16 %v2136, %v2134
        %v2198 = vpack.c.bf16 %v2139, %v2137
        %v2199 = vpack.c.bf16 %v2140, %v2138
        %v2200 = vpack.c.bf16 %v2143, %v2141
        %v2201 = vpack.c.bf16 %v2144, %v2142
        %v2202 = vpack.c.bf16 %v2147, %v2145
        %v2203 = vpack.c.bf16 %v2148, %v2146
        %v2204 = vpack.c.bf16 %v2151, %v2149
        %v2205 = vpack.c.bf16 %v2152, %v2150
        %v2206 = vpack.c.bf16 %v2155, %v2153
        %v2207 = vpack.c.bf16 %v2156, %v2154
        %v2208 = vpack.c.bf16 %v2159, %v2157
        %v2209 = vpack.c.bf16 %v2160, %v2158
        %v2210 = vpack.c.bf16 %v2163, %v2161
        %v2211 = vpack.c.bf16 %v2164, %v2162
        %v2212 = vpack.c.bf16 %v2167, %v2165
        %v2213 = vpack.c.bf16 %v2168, %v2166
        %v2214 = vpack.c.bf16 %v2171, %v2169
        %v2215 = vpack.c.bf16 %v2172, %v2170
        %v2216 = vpack.c.bf16 %v2175, %v2173
        %v2217 = vpack.c.bf16 %v2176, %v2174
        %v2218 = vpack.c.bf16 %v2179, %v2177
        %v2219 = vpack.c.bf16 %v2180, %v2178
        %v2220 = vpack.c.bf16 %v2183, %v2181
        %v2221 = vpack.c.bf16 %v2184, %v2182
        %v2222 = vpack.c.bf16 %v2187, %v2185
        %v2223 = vpack.c.bf16 %v2188, %v2186
        %v2224 = vpack.c.bf16 %v2191, %v2189
        %v2225 = vpack.c.bf16 %v2192, %v2190
        %2227 = vst [vmem:[#allocation1] ss:$4 sm:$0xff] %v2193
        %v2228 = vld.sshfl [vmem:[#allocation1] sm:$0xff pattern:$0x73625140]
        %v2229 = vld.sshfl [vmem:[#allocation1 + $0x8] sm:$0xff pattern:$0x73625140]
        %2232 = vmatpush.bf16.xpose.msra.mxu0 %v2208
        %2233 = vmatpush.bf16.xpose.msra.mxu0 %v2206
        %2234 = vmatpush.bf16.xpose.msra.mxu0 %v2204
        %2235 = vmatpush.bf16.xpose.msra.mxu0 %v2202
        %2236 = vmatpush.bf16.xpose.msra.mxu0 %v2200
        %2237 = vmatpush.bf16.xpose.msra.mxu0 %v2198
        %2238 = vmatpush.bf16.xpose.msra.mxu0 %v2196
        %2239 = vmatpush.bf16.xpose.msra.mxu0 %v2194
        %2240 = vmatmul.bf16.gmra.mxu0 %v2228
        %v2241 = vpop.f32.mrf.mxu0
        %v2242 = vadd.f32 0.0, %v2241
        %v2243 = vpop.f32.mrf.mxu0
        %2244 = vdwg.mxu0
        %2245 = vmatpush.bf16.xpose.msra.mxu0 %v2209
        %2246 = vmatpush.bf16.xpose.msra.mxu0 %v2207
        %2247 = vmatpush.bf16.xpose.msra.mxu0 %v2205
        %2248 = vmatpush.bf16.xpose.msra.mxu0 %v2203
        %2249 = vmatpush.bf16.xpose.msra.mxu0 %v2201
        %2250 = vmatpush.bf16.xpose.msra.mxu0 %v2199
        %2251 = vmatpush.bf16.xpose.msra.mxu0 %v2197
        %2252 = vmatpush.bf16.xpose.msra.mxu0 %v2195
        %2253 = vmatmul.bf16.gmra.mxu0 %v2229
        %v2254 = vpop.f32.mrf.mxu0
        %v2255 = vadd.f32 %v2242, %v2254
        %v2256 = vpop.f32.mrf.mxu0
        %2257 = vdwg.mxu0
        %2258 = vmatpush.bf16.xpose.msra.mxu0 %v2224
        %2259 = vmatpush.bf16.xpose.msra.mxu0 %v2222
        %2260 = vmatpush.bf16.xpose.msra.mxu0 %v2220
        %2261 = vmatpush.bf16.xpose.msra.mxu0 %v2218
        %2262 = vmatpush.bf16.xpose.msra.mxu0 %v2216
        %2263 = vmatpush.bf16.xpose.msra.mxu0 %v2214
        %2264 = vmatpush.bf16.xpose.msra.mxu0 %v2212
        %2265 = vmatpush.bf16.xpose.msra.mxu0 %v2210
        %2266 = vmatmul.bf16.gmra.mxu0 %v2228
        %v2267 = vpop.f32.mrf.mxu0
        %v2268 = vadd.f32 0.0, %v2267
        %v2269 = vpop.f32.mrf.mxu0
        %2270 = vdwg.mxu0
        %2271 = vmatpush.bf16.xpose.msra.mxu0 %v2225
        %2272 = vmatpush.bf16.xpose.msra.mxu0 %v2223
        %2273 = vmatpush.bf16.xpose.msra.mxu0 %v2221
        %2274 = vmatpush.bf16.xpose.msra.mxu0 %v2219
        %2275 = vmatpush.bf16.xpose.msra.mxu0 %v2217
        %2276 = vmatpush.bf16.xpose.msra.mxu0 %v2215
        %2277 = vmatpush.bf16.xpose.msra.mxu0 %v2213
        %2278 = vmatpush.bf16.xpose.msra.mxu0 %v2211
        %2279 = vmatmul.bf16.gmra.mxu0 %v2229
        %v2280 = vpop.f32.mrf.mxu0
        %v2281 = vadd.f32 %v2268, %v2280
        %v2282 = vpop.f32.mrf.mxu0
        %2283 = vdwg.mxu0
        %v2286 = vrot.slane %v2281, 4
        %v2287 = vsel %vm553, %v2255, %v2286
        %v2289 = vadd.f32 %v543, %v2287
        %2290 = vst [vmem:[%s405] sm:$0xff] %v2289
        %s2291 = sand.u32 %s214, 1
        %s2292 = scalar_lea.sflag [#allocation7], %s2291
        %s2293 = sand.u32 %s214, 1
        %s2294 = smul.addr %s2293, 8
        %s2295 = scalar_lea.vmem [#allocation13], %s2294
        // Predicated region
        $region69: #{tpu_custom_call.1} parent=47 // pred_check
          %p2296 = pneg %p224
        $region70: #{tpu_custom_call.1} parent=47 // pred_check_branch
          %2298 = sbr.rel (%p2296) target = $region72
        $region71: #{tpu_custom_call.1} parent=47 // pred_region
          %s2299 = smul.u32 2, %s33
          %2301 = vsyncadd %s2292, 0
          %s2302 = smul.addr %s32, 2
          %s2303 = sadd.s32 %s2299, %s2302
          %s2304 = smul.addr %s2303, 4
          %s2305 = scalar_lea.hbm %s7, %s2304
          %s2307 = sshll.u32 %s2295, 4
          %s2308 = int_to_ptr.vmem [resolvable:$true] %s2307
          %s2309 = sshll.u32 %s2305, 4
          %s2310 = int_to_ptr.hbm [resolvable:$true] %s2309
          %2312 = dma.vmem_to_hbm [thread:$0]  %s2308, 128, %s2310, %s2292
        $region72: #{tpu_custom_call.1} parent=47 // pred_fallthru
          _
      $region48: #{tpu_custom_call.1} parent=5 // pred_fallthru
        _
      %p2313 = scmp.le.s32.totalorder 2, %s23
      // Predicated region
      $region73: #{tpu_custom_call.1} parent=5 // pred_check
        %p2314 = pneg %p2313
      $region74: #{tpu_custom_call.1} parent=5 // pred_check_branch
        %2316 = sbr.rel (%p2314) target = $region76
      $region75: #{tpu_custom_call.1} parent=5 // pred_region
        %s2317 = ssub.s32 %s23, 2
        // Predicated region
        $region77: #{tpu_custom_call.1} parent=75 // pred_check
          %p2318 = pneg %p230
        $region78: #{tpu_custom_call.1} parent=75 // pred_check_branch
          %2320 = sbr.rel (%p2318) target = $region80
        $region79: #{tpu_custom_call.1} parent=75 // pred_region
          %s2321 = sand.u32 %s215, 1
          %s2322 = scalar_lea.sflag [#allocation7], %s2321
          %s2323 = sand.u32 %s215, 1
          %s2324 = smul.addr %s2323, 8
          %s2325 = scalar_lea.vmem [#allocation13], %s2324
          %2327 = dma.done %s2322, 128
        $region80: #{tpu_custom_call.1} parent=75 // pred_fallthru
          _
      $region76: #{tpu_custom_call.1} parent=5 // pred_fallthru
        _
    $region6: #{tpu_custom_call.1} parent=1 // loop_footer
      %s27 = sadd.s32 1, %s23
    $region7: #{tpu_custom_call.1} parent=1 // loop_footer_branch
      %22 = sbr.rel target = $region3
    $region8: #{tpu_custom_call.1} parent=1 // loop_exit
      _
    %2328 = vsyncpa [#allocation6], 1
    %s2329 = scalar_lea.sflag [#allocation6], 1
    %2330 = vsyncpa %s2329, 1
    %2331 = vsyncpa [#allocation11], 1
    %s2332 = scalar_lea.sflag [#allocation11], 1
    %2333 = vsyncpa %s2332, 1
    %2334 = vsyncpa [#allocation7], 1
    %s2335 = scalar_lea.sflag [#allocation7], 1
    %2336 = vsyncpa %s2335, 1
    %2337 = vsyncpa [#allocation8], 1
    %s2338 = scalar_lea.sflag [#allocation8], 1
    %2339 = vsyncpa %s2338, 1

</llo_original>
